<compile_context>
chip_gen: v7x
topology: tpu7x:2x2x1
jax: 0.10.0
libtpu: 0.0.40
codegen_flags: <defaults>
</compile_context>

<pallas_src>
import functools

import jax
import jax.numpy as jnp
from jax.experimental import pallas as pl
from jax.experimental.pallas import tpu as pltpu


def _mha_kernel(c_ref, bias_ref, wq_ref, wkv_ref, wo_ref, gamma_ref, beta_ref,
                o_ref, *, n_head, eps):
    rows_c, hidden = c_ref.shape
    qs, ks = bias_ref.shape
    nd = wq_ref.shape[1]                    # n_head * head_dim
    head_dim = nd // n_head
    bblk = rows_c // ks                     # batch elements in this grid step
    ms = ks - qs                            # memory length

    c_bf = c_ref[...].astype(jnp.bfloat16)  # (bblk*K, H)

    # Query / residual rows are the tail Q rows of each batch's [mem; x] block;
    # no separate x stream is DMA'd.
    if bblk == 1:
        x_f32 = c_ref[pl.ds(ms, qs), :].astype(jnp.float32)           # (Q, H)
    else:
        x_f32 = jnp.concatenate(
            [c_ref[pl.ds(b * ks + ms, qs), :].astype(jnp.float32)
             for b in range(bblk)], axis=0)                           # (bblk*Q, H)
    x_bf = x_f32.astype(jnp.bfloat16)

    wq = wq_ref[...]                        # (H, n*D) bf16, 1/sqrt(D) folded in
    wkv = wkv_ref[...]                      # (H, 2*n*D) bf16 (K and V fused)
    wo = wo_ref[...]                        # (n*D, H) bf16
    gamma = gamma_ref[...]                  # (1, H) f32
    beta = beta_ref[...]                    # (1, H) f32
    bias = bias_ref[...][None]              # (1, Q, K) additive mask bias, f32

    # Fused full-lane-width projections: one MXU matmul each, bf16 in / f32 acc,
    # cast to bf16 exactly once (only downstream use is as MXU operands).
    q2d = jnp.dot(x_bf, wq,
                  preferred_element_type=jnp.float32).astype(jnp.bfloat16)   # (bblk*Q, n*D)
    kv2d = jnp.dot(c_bf, wkv,
                   preferred_element_type=jnp.float32).astype(jnp.bfloat16)  # (bblk*K, 2*n*D)

    # Attention core per batch element (heads batched in the leading dim).
    att_rows = []
    for b in range(bblk):                   # static; default block_batch == 1
        q_b = q2d[b * qs:(b + 1) * qs, :].reshape(qs, n_head, head_dim)
        q_b = jnp.transpose(q_b, (1, 0, 2))                       # (n, Q, D)
        kv_b = kv2d[b * ks:(b + 1) * ks, :]
        k_b = jnp.transpose(kv_b[:, :nd].reshape(ks, n_head, head_dim),
                            (1, 0, 2))                            # (n, K, D)
        v_b = jnp.transpose(kv_b[:, nd:].reshape(ks, n_head, head_dim),
                            (1, 0, 2))                            # (n, K, D)

        # scores (scale already folded into Wq), additive mask bias, all f32.
        s = jnp.einsum('nqd,nkd->nqk', q_b, k_b,
                       preferred_element_type=jnp.float32)        # (n, Q, K)
        s = s + bias

        # softmax over keys; normalization via approx reciprocal (EUP slot).
        m = jnp.max(s, axis=-1, keepdims=True)
        p = jnp.exp(s - m)
        denom = jnp.sum(p, axis=-1, keepdims=True)
        p = p * pl.reciprocal(denom, approx=True)

        att = jnp.einsum('nqk,nkd->nqd', p.astype(jnp.bfloat16), v_b,
                         preferred_element_type=jnp.float32)      # (n, Q, D)

        # head-merge: (n, Q, D) -> (Q, n*D) bf16 rows for the fused o-projection
        att_rows.append(jnp.transpose(att.astype(jnp.bfloat16),
                                      (1, 0, 2)).reshape(qs, nd))

    att2d = att_rows[0] if bblk == 1 else jnp.concatenate(att_rows, axis=0)

    # Single fused output projection: contraction n*D, output width H.
    out = jnp.dot(att2d, wo, preferred_element_type=jnp.float32)  # (bblk*Q, H)

    # Residual + post LayerNorm (pre_lnorm=False path), all f32, then one
    # lane-dense store for the whole block.
    out = x_f32 + out
    mean = jnp.mean(out, axis=-1, keepdims=True)
    var = jnp.mean((out - mean) ** 2, axis=-1, keepdims=True)
    out = (out - mean) * jax.lax.rsqrt(var + eps)
    out = out * gamma + beta
    o_ref[...] = out.astype(o_ref.dtype)


def multihead_att(x, mem, mask, params, *, n_head, head_dim, block_batch=1):
    """x: [B,Q,H], mem: [B,M,H] or None, mask: [Q,K] bool (True => masked)."""
    bs, qs, hidden = x.shape
    c = x if mem is None else jnp.concatenate([mem, x], axis=1)
    ks = c.shape[1]
    nd = n_head * head_dim
    assert bs % block_batch == 0
    scale = 1.0 / (head_dim ** 0.5)

    # Host-side weight prep (free in HBM): fold scale into Wq, keep kv_net
    # fused as one (H, 2*n*D) weight, keep o_net 2-D; cast to bf16 for the MXU.
    wq2d = (params["wq"] * scale).astype(jnp.bfloat16)           # (H, n*D)
    wkv2d = params["wkv"].astype(jnp.bfloat16)                   # (H, 2*n*D)
    wo2d = params["wo"].astype(jnp.bfloat16)                     # (n*D, H)

    gamma = params["gamma"].reshape(1, hidden).astype(jnp.float32)
    beta = params["beta"].reshape(1, hidden).astype(jnp.float32)

    # Additive mask bias: True/nonzero => large negative (robust vs -inf NaN);
    # must stay f32 (added to f32 scores).
    bias = jnp.where(mask.astype(bool), -1e30, 0.0).astype(jnp.float32)  # (Q, K)

    # Lane-dense 2-D activation slab (row = batch*seq position); x rows are the
    # tail Q rows of each batch's K-row block, so no separate x input.
    c2d = c.reshape(bs * ks, hidden)

    kernel = functools.partial(_mha_kernel, n_head=n_head, eps=1e-5)
    grid = (bs // block_batch,)

    out2d = pl.pallas_call(
        kernel,
        out_shape=jax.ShapeDtypeStruct((bs * qs, hidden), x.dtype),
        grid_spec=pltpu.PrefetchScalarGridSpec(
            num_scalar_prefetch=0,
            grid=grid,
            in_specs=[
                pl.BlockSpec((block_batch * ks, hidden), lambda b: (b, 0)),   # c rows
                pl.BlockSpec((qs, ks), lambda b: (0, 0)),                     # mask bias
                pl.BlockSpec((hidden, nd), lambda b: (0, 0)),                 # Wq (scaled)
                pl.BlockSpec((hidden, 2 * nd), lambda b: (0, 0)),             # Wkv (fused)
                pl.BlockSpec((nd, hidden), lambda b: (0, 0)),                 # Wo
                pl.BlockSpec((1, hidden), lambda b: (0, 0)),                  # gamma
                pl.BlockSpec((1, hidden), lambda b: (0, 0)),                  # beta
            ],
            out_specs=pl.BlockSpec((block_batch * qs, hidden), lambda b: (b, 0)),
        ),
        compiler_params=pltpu.CompilerParams(
            dimension_semantics=("parallel",)),
    )(c2d, bias, wq2d, wkv2d, wo2d, gamma, beta)

    return out2d.reshape(bs, qs, hidden)


def reference_jax(x, mem, mask, params, *, n_head, head_dim):
    """Pure-JAX f32 reference mirroring the PyTorch forward (eval mode)."""
    bs, qs, hidden = x.shape
    c = x if mem is None else jnp.concatenate([mem, x], axis=1)
    ks = c.shape[1]
    scale = 1.0 / (head_dim ** 0.5)

    kv = c @ params["wkv"]
    key, value = jnp.split(kv, 2, axis=-1)
    query = x @ params["wq"]

    k = key.reshape(bs, ks, n_head, head_dim)
    v = value.reshape(bs, ks, n_head, head_dim)
    q = query.reshape(bs, qs, n_head, head_dim)
    att = jnp.einsum("bqnd,bknd->bqkn", q, k) * scale
    att = jnp.where(mask[None, :, :, None], -jnp.inf, att)
    prob = jax.nn.softmax(att, axis=2)
    attended = jnp.einsum("bqkn,bknd->bqnd", prob, v).reshape(bs, qs, -1)
    out = attended @ params["wo"]
    out = x + out
    mean = jnp.mean(out, axis=-1, keepdims=True)
    var = jnp.mean((out - mean) ** 2, axis=-1, keepdims=True)
    out = (out - mean) / jnp.sqrt(var + 1e-5)
    return out * params["gamma"] + params["beta"]


if __name__ == "__main__":
    # Small, self-consistent shapes.
    batch, q_len, mem_len = 2, 8, 8
    hidden_dim, n_head, head_dim = 32, 4, 8     # n_head*head_dim == hidden_dim
    k_len = q_len + mem_len

    key0 = jax.random.PRNGKey(0)
    kx, km, kq, kkv, ko = jax.random.split(key0, 5)

    x = jax.random.normal(kx, (batch, q_len, hidden_dim), jnp.float32)
    mem = jax.random.normal(km, (batch, mem_len, hidden_dim), jnp.float32)

    nhd = n_head * head_dim
    params = {
        # Stored as (in, out) so forward does x @ W (transposed vs torch Linear).
        "wq": 0.05 * jax.random.normal(kq, (hidden_dim, nhd), jnp.float32),
        "wkv": 0.05 * jax.random.normal(kkv, (hidden_dim, 2 * nhd), jnp.float32),
        "wo": 0.05 * jax.random.normal(ko, (nhd, hidden_dim), jnp.float32),
        "gamma": jnp.ones((hidden_dim,), jnp.float32),
        "beta": jnp.zeros((hidden_dim,), jnp.float32),
    }

    # Causal-style mask: True => masked with -inf (matches masked_fill_).
    q_idx = jnp.arange(q_len)[:, None]
    k_idx = jnp.arange(k_len)[None, :]
    mask = k_idx > (q_idx + mem_len)           # (Q, K) bool

    # TODO(synk): dropout/dropatt are identity here (eval mode); training-mode
    # stochastic dropout and the pre_lnorm=True / ed_att=True paths are not
    # implemented in the kernel.

    out = multihead_att(x, mem, mask, params, n_head=n_head, head_dim=head_dim,
                        block_batch=1)
    out = jax.block_until_ready(out)

    ref = reference_jax(x, mem, mask, params, n_head=n_head, head_dim=head_dim)
    # Tolerance accounts for bf16 MXU inputs + approx reciprocal in the kernel
    # (reference is pure f32); outputs are LayerNorm'd (O(1)), so 2e-2 still
    # catches any structural error.
    assert jnp.allclose(out, ref, rtol=2e-2, atol=2e-2), "mismatch vs reference"

    print("KERNEL_OK")
</pallas_src>

<mosaic_0001>
module attributes {stable_mosaic.version = 11 : i64} {
  func.func @_mha_kernel(%arg0: i32, %arg1: memref<16x32xf32, #tpu.memory_space<vmem>>, %arg2: memref<8x16xf32, #tpu.memory_space<vmem>>, %arg3: memref<32x32xbf16, #tpu.memory_space<vmem>>, %arg4: memref<32x64xbf16, #tpu.memory_space<vmem>>, %arg5: memref<32x32xbf16, #tpu.memory_space<vmem>>, %arg6: memref<1x32xf32, #tpu.memory_space<vmem>>, %arg7: memref<1x32xf32, #tpu.memory_space<vmem>>, %arg8: memref<8x32xf32, #tpu.memory_space<vmem>>) attributes {dimension_semantics = [#tpu.dimension_semantics<parallel>], iteration_bounds = array<i64: 2>, scalar_prefetch = 0 : i64, scratch_operands = 0 : i64, tpu.core_type = #tpu.core_type<tc>, window_params = [{transform_indices = @transform_0, window_bounds = array<i64: 16, 32>}, {pipeline_mode = #tpu.pipeline_mode<synchronous>, transform_indices = @transform_1, window_bounds = array<i64: 8, 16>}, {pipeline_mode = #tpu.pipeline_mode<synchronous>, transform_indices = @transform_2, window_bounds = array<i64: 32, 32>}, {pipeline_mode = #tpu.pipeline_mode<synchronous>, transform_indices = @transform_3, window_bounds = array<i64: 32, 64>}, {pipeline_mode = #tpu.pipeline_mode<synchronous>, transform_indices = @transform_4, window_bounds = array<i64: 32, 32>}, {pipeline_mode = #tpu.pipeline_mode<synchronous>, transform_indices = @transform_5, window_bounds = array<i64: 1, 32>}, {pipeline_mode = #tpu.pipeline_mode<synchronous>, transform_indices = @transform_6, window_bounds = array<i64: 1, 32>}, {transform_indices = @transform_7, window_bounds = array<i64: 8, 32>}]} {
    %c0 = arith.constant 0 : index
    %c0_0 = arith.constant 0 : index
    %0 = vector.load %arg1[%c0, %c0_0] : memref<16x32xf32, #tpu.memory_space<vmem>>, vector<16x32xf32>
    %1 = arith.truncf %0 : vector<16x32xf32> to vector<16x32xbf16>
    %c8 = arith.constant 8 : index
    %c0_1 = arith.constant 0 : index
    %2 = vector.load %arg1[%c8, %c0_1] : memref<16x32xf32, #tpu.memory_space<vmem>>, vector<8x32xf32>
    %3 = arith.truncf %2 : vector<8x32xf32> to vector<8x32xbf16>
    %c0_2 = arith.constant 0 : index
    %c0_3 = arith.constant 0 : index
    %4 = vector.load %arg3[%c0_2, %c0_3] : memref<32x32xbf16, #tpu.memory_space<vmem>>, vector<32x32xbf16>
    %c0_4 = arith.constant 0 : index
    %c0_5 = arith.constant 0 : index
    %5 = vector.load %arg4[%c0_4, %c0_5] : memref<32x64xbf16, #tpu.memory_space<vmem>>, vector<32x64xbf16>
    %c0_6 = arith.constant 0 : index
    %c0_7 = arith.constant 0 : index
    %6 = vector.load %arg5[%c0_6, %c0_7] : memref<32x32xbf16, #tpu.memory_space<vmem>>, vector<32x32xbf16>
    %c0_8 = arith.constant 0 : index
    %c0_9 = arith.constant 0 : index
    %7 = vector.load %arg6[%c0_8, %c0_9] : memref<1x32xf32, #tpu.memory_space<vmem>>, vector<1x32xf32>
    %c0_10 = arith.constant 0 : index
    %c0_11 = arith.constant 0 : index
    %8 = vector.load %arg7[%c0_10, %c0_11] : memref<1x32xf32, #tpu.memory_space<vmem>>, vector<1x32xf32>
    %c0_12 = arith.constant 0 : index
    %c0_13 = arith.constant 0 : index
    %9 = vector.load %arg2[%c0_12, %c0_13] : memref<8x16xf32, #tpu.memory_space<vmem>>, vector<8x16xf32>
    %10 = vector.shape_cast %9 : vector<8x16xf32> to vector<1x8x16xf32>
    %cst = arith.constant dense<0.000000e+00> : vector<8x32xf32>
    %11 = tpu.matmul %3, %4, %cst {dimension_numbers = #tpu.dot_dimension_numbers<[1], [0], [0], [1], [0, 0, 1, 1], [], []>} : vector<8x32xbf16>, vector<32x32xbf16>, vector<8x32xf32> -> vector<8x32xf32>
    %12 = arith.truncf %11 : vector<8x32xf32> to vector<8x32xbf16>
    %cst_14 = arith.constant dense<0.000000e+00> : vector<16x64xf32>
    %13 = tpu.matmul %1, %5, %cst_14 {dimension_numbers = #tpu.dot_dimension_numbers<[1], [0], [0], [1], [0, 0, 1, 1], [], []>} : vector<16x32xbf16>, vector<32x64xbf16>, vector<16x64xf32> -> vector<16x64xf32>
    %14 = arith.truncf %13 : vector<16x64xf32> to vector<16x64xbf16>
    %15 = vector.shape_cast %12 : vector<8x32xbf16> to vector<8x4x8xbf16>
    %16 = tpu.transpose %15, [1, 0, 2] : vector<8x4x8xbf16> -> vector<4x8x8xbf16>
    %17 = vector.extract_strided_slice %14 {offsets = [0, 0], sizes = [16, 32], strides = [1, 1]} : vector<16x64xbf16> to vector<16x32xbf16>
    %18 = vector.shape_cast %17 : vector<16x32xbf16> to vector<16x4x8xbf16>
    %19 = tpu.transpose %18, [1, 0, 2] : vector<16x4x8xbf16> -> vector<4x16x8xbf16>
    %20 = vector.extract_strided_slice %14 {offsets = [0, 32], sizes = [16, 32], strides = [1, 1]} : vector<16x64xbf16> to vector<16x32xbf16>
    %21 = vector.shape_cast %20 : vector<16x32xbf16> to vector<16x4x8xbf16>
    %22 = tpu.transpose %21, [1, 0, 2] : vector<16x4x8xbf16> -> vector<4x16x8xbf16>
    "tpu.trace_start"() <{level = 10 : i32, message = "nqd,nkd->nqk"}> : () -> ()
    %cst_15 = arith.constant dense<0.000000e+00> : vector<4x8x16xf32>
    %23 = tpu.matmul %16, %19, %cst_15 {dimension_numbers = #tpu.dot_dimension_numbers<[2], [2], [1], [1], [0, 0, 0, 1, 1, 1], [0], [0]>} : vector<4x8x8xbf16>, vector<4x16x8xbf16>, vector<4x8x16xf32> -> vector<4x8x16xf32>
    "tpu.trace_stop"() : () -> ()
    %24 = vector.broadcast %10 : vector<1x8x16xf32> to vector<4x8x16xf32>
    %25 = arith.addf %23, %24 : vector<4x8x16xf32>
    %cst_16 = arith.constant dense<0xFF800000> : vector<4x8xf32>
    %26 = vector.multi_reduction <maximumf>, %25, %cst_16 [2] : vector<4x8x16xf32> to vector<4x8xf32>
    %27 = vector.shape_cast %26 : vector<4x8xf32> to vector<4x8x1xf32>
    %28 = vector.broadcast %27 : vector<4x8x1xf32> to vector<4x8x16xf32>
    %29 = arith.subf %25, %28 : vector<4x8x16xf32>
    %30 = math.exp %29 : vector<4x8x16xf32>
    %cst_17 = arith.constant dense<0.000000e+00> : vector<4x8xf32>
    %31 = vector.multi_reduction <add>, %30, %cst_17 [2] : vector<4x8x16xf32> to vector<4x8xf32>
    %32 = vector.shape_cast %31 : vector<4x8xf32> to vector<4x8x1xf32>
    %33 = tpu.reciprocal %32 {approx = true} : vector<4x8x1xf32> -> vector<4x8x1xf32>
    %34 = vector.broadcast %33 : vector<4x8x1xf32> to vector<4x8x16xf32>
    %35 = arith.mulf %30, %34 : vector<4x8x16xf32>
    %36 = arith.truncf %35 : vector<4x8x16xf32> to vector<4x8x16xbf16>
    "tpu.trace_start"() <{level = 10 : i32, message = "nqk,nkd->nqd"}> : () -> ()
    %cst_18 = arith.constant dense<0.000000e+00> : vector<4x8x8xf32>
    %37 = tpu.matmul %36, %22, %cst_18 {dimension_numbers = #tpu.dot_dimension_numbers<[2], [1], [1], [2], [0, 0, 0, 1, 1, 2], [0], [0]>} : vector<4x8x16xbf16>, vector<4x16x8xbf16>, vector<4x8x8xf32> -> vector<4x8x8xf32>
    "tpu.trace_stop"() : () -> ()
    %38 = arith.truncf %37 : vector<4x8x8xf32> to vector<4x8x8xbf16>
    %39 = tpu.transpose %38, [1, 0, 2] : vector<4x8x8xbf16> -> vector<8x4x8xbf16>
    %40 = vector.shape_cast %39 : vector<8x4x8xbf16> to vector<8x32xbf16>
    %cst_19 = arith.constant dense<0.000000e+00> : vector<8x32xf32>
    %41 = tpu.matmul %40, %6, %cst_19 {dimension_numbers = #tpu.dot_dimension_numbers<[1], [0], [0], [1], [0, 0, 1, 1], [], []>} : vector<8x32xbf16>, vector<32x32xbf16>, vector<8x32xf32> -> vector<8x32xf32>
    %42 = arith.addf %2, %41 : vector<8x32xf32>
    %cst_20 = arith.constant dense<0.000000e+00> : vector<8xf32>
    %43 = vector.multi_reduction <add>, %42, %cst_20 [1] : vector<8x32xf32> to vector<8xf32>
    %44 = vector.shape_cast %43 : vector<8xf32> to vector<8x1xf32>
    %cst_21 = arith.constant 3.200000e+01 : f32
    %45 = vector.broadcast %cst_21 : f32 to vector<8x1xf32>
    %46 = arith.divf %44, %45 : vector<8x1xf32>
    %47 = vector.broadcast %46 : vector<8x1xf32> to vector<8x32xf32>
    %48 = arith.subf %42, %47 : vector<8x32xf32>
    %49 = arith.mulf %48, %48 : vector<8x32xf32>
    %cst_22 = arith.constant dense<0.000000e+00> : vector<8xf32>
    %50 = vector.multi_reduction <add>, %49, %cst_22 [1] : vector<8x32xf32> to vector<8xf32>
    %51 = vector.shape_cast %50 : vector<8xf32> to vector<8x1xf32>
    %cst_23 = arith.constant 3.200000e+01 : f32
    %52 = vector.broadcast %cst_23 : f32 to vector<8x1xf32>
    %53 = arith.divf %51, %52 : vector<8x1xf32>
    %54 = vector.broadcast %46 : vector<8x1xf32> to vector<8x32xf32>
    %55 = arith.subf %42, %54 : vector<8x32xf32>
    %cst_24 = arith.constant 9.99999974E-6 : f32
    %56 = vector.broadcast %cst_24 : f32 to vector<8x1xf32>
    %57 = arith.addf %53, %56 : vector<8x1xf32>
    %58 = math.rsqrt %57 : vector<8x1xf32>
    %59 = vector.broadcast %58 : vector<8x1xf32> to vector<8x32xf32>
    %60 = arith.mulf %55, %59 : vector<8x32xf32>
    %61 = vector.broadcast %7 : vector<1x32xf32> to vector<8x32xf32>
    %62 = arith.mulf %60, %61 : vector<8x32xf32>
    %63 = vector.broadcast %8 : vector<1x32xf32> to vector<8x32xf32>
    %64 = arith.addf %62, %63 : vector<8x32xf32>
    %c0_25 = arith.constant 0 : index
    %c0_26 = arith.constant 0 : index
    %65 = vector.load %arg8[%c0_25, %c0_26] : memref<8x32xf32, #tpu.memory_space<vmem>>, vector<8x32xf32>
    tpu.vector_store %arg8[%c0_25, %c0_26], %64 {strides = array<i32>} : memref<8x32xf32, #tpu.memory_space<vmem>>, vector<8x32xf32>,
    return
  }
  func.func @transform_0(%arg0: i32) -> (i32, i32) {
    %c0_i32 = arith.constant 0 : i32
    %c0_i32_0 = arith.constant 0 : i32
    return %arg0, %c0_i32 : i32, i32
  }
  func.func @transform_1(%arg0: i32) -> (i32, i32) {
    %c0_i32 = arith.constant 0 : i32
    %c0_i32_0 = arith.constant 0 : i32
    %c0_i32_1 = arith.constant 0 : i32
    return %c0_i32, %c0_i32_0 : i32, i32
  }
  func.func @transform_2(%arg0: i32) -> (i32, i32) {
    %c0_i32 = arith.constant 0 : i32
    %c0_i32_0 = arith.constant 0 : i32
    %c0_i32_1 = arith.constant 0 : i32
    return %c0_i32, %c0_i32_0 : i32, i32
  }
  func.func @transform_3(%arg0: i32) -> (i32, i32) {
    %c0_i32 = arith.constant 0 : i32
    %c0_i32_0 = arith.constant 0 : i32
    %c0_i32_1 = arith.constant 0 : i32
    return %c0_i32, %c0_i32_0 : i32, i32
  }
  func.func @transform_4(%arg0: i32) -> (i32, i32) {
    %c0_i32 = arith.constant 0 : i32
    %c0_i32_0 = arith.constant 0 : i32
    %c0_i32_1 = arith.constant 0 : i32
    return %c0_i32, %c0_i32_0 : i32, i32
  }
  func.func @transform_5(%arg0: i32) -> (i32, i32) {
    %c0_i32 = arith.constant 0 : i32
    %c0_i32_0 = arith.constant 0 : i32
    %c0_i32_1 = arith.constant 0 : i32
    return %c0_i32, %c0_i32_0 : i32, i32
  }
  func.func @transform_6(%arg0: i32) -> (i32, i32) {
    %c0_i32 = arith.constant 0 : i32
    %c0_i32_0 = arith.constant 0 : i32
    %c0_i32_1 = arith.constant 0 : i32
    return %c0_i32, %c0_i32_0 : i32, i32
  }
  func.func @transform_7(%arg0: i32) -> (i32, i32) {
    %c0_i32 = arith.constant 0 : i32
    %c0_i32_0 = arith.constant 0 : i32
    return %arg0, %c0_i32 : i32, i32
  }
}

</mosaic_0001>

<llo_original>
// kernel: tpu_custom_call.1
$region0: #{tpu_custom_call.1}
  #allocation0 [shape = 'u32[]', space=smem, size = 0x4, offset = 0x4, fixed_abs, tag = 'smem constant byte address 0x4 - core index']
  #allocation1 [shape = 'u32[144,128]{1,0:T(1,128)}', space=vmem, size = 0x12000, scoped, tag = 'internal scratch']
  %s0 = inlined_call_operand.hbm [shape: f32[32,32], index: 0, kind: input, shape index: {}]
  %s1 = inlined_call_operand.hbm [shape: f32[8,16], index: 1, kind: input, shape index: {}]
  %s2 = inlined_call_operand.hbm [shape: bf16[32,32], index: 2, kind: input, shape index: {}]
  %s3 = inlined_call_operand.hbm [shape: bf16[32,64], index: 3, kind: input, shape index: {}]
  %s4 = inlined_call_operand.hbm [shape: bf16[32,32], index: 4, kind: input, shape index: {}]
  %s5 = inlined_call_operand.vmem [shape: f32[1,32], index: 5, kind: input, shape index: {}]
  %s6 = inlined_call_operand.vmem [shape: f32[1,32], index: 6, kind: input, shape index: {}]
  %s7 = inlined_call_operand.hbm [shape: f32[16,32], index: 7, kind: output, shape index: {}]
  %s8 = sld [smem:[#allocation0]]
  $region81: #{tpu_custom_call.1} parent=0
    _
  %s10 = ssub.s32 1, %s8
  %s11 = scalar_select 0, %s10, %s8
  $region1: #{tpu_custom_call.1} parent=0
    #allocation2 [shape = 'u8[16384]{0}', space=vmem, size = 0x4000, scoped, tag = 'input window, operand 0']
    #allocation3 [shape = 's32[2]{0}', space=sflag, size = 0x8, scoped, tag = 'scoped memory for tpu_custom_call.1']
    #allocation4 [shape = 's32[2]{0}', space=sflag, size = 0x8, scoped, tag = 'scoped memory for tpu_custom_call.1']
    #allocation5 [shape = 'u8[4096]{0}', space=vmem, size = 0x1000, scoped, tag = 'input window, operand 1, single buffered']
    #allocation6 [shape = 's32[1]{0}', space=sflag, size = 0x4, scoped, tag = 'scoped memory for tpu_custom_call.1']
    #allocation7 [shape = 'u8[8192]{0}', space=vmem, size = 0x2000, scoped, tag = 'input window, operand 2, single buffered']
    #allocation8 [shape = 'u8[8192]{0}', space=vmem, size = 0x2000, scoped, tag = 'input window, operand 3, single buffered']
    #allocation9 [shape = 's32[1]{0}', space=sflag, size = 0x4, scoped, tag = 'scoped memory for tpu_custom_call.1']
    #allocation10 [shape = 'u8[8192]{0}', space=vmem, size = 0x2000, scoped, tag = 'input window, operand 4, single buffered']
    #allocation11 [shape = 'u8[8192]{0}', space=vmem, size = 0x2000, scoped, tag = 'output window, operand 0']
    %12 = vsyncpa [#allocation3], 0
    %s13 = scalar_lea.sflag [#allocation3], 1
    %14 = vsyncpa %s13, 0
    %15 = vsyncpa [#allocation6], 0
    %16 = vsyncpa [#allocation9], 0
    %17 = vsyncpa [#allocation4], 0
    %s18 = scalar_lea.sflag [#allocation4], 1
    %19 = vsyncpa %s18, 0
    loop: start=0, step=1, limit=4
    $region2: #{tpu_custom_call.1} parent=1 // loop_pre_header
      _
    $region3: #{tpu_custom_call.1} parent=1 // loop_header
      %s21 = sphi 0, %s25
      %p22 = scmp.ge.s32.totalorder %s21, 4
      %s31 = sphi 0, %s33
      %s34 = sphi 0, %s31
      %s35 = sphi 0, %s34
      %s51 = sphi 0, %s35
      %s55 = sphi 0, %s55
      %s57 = sphi 0, %s55
      %s58 = sphi 0, %s57
      %s72 = sphi 0, %s58
      %s76 = sphi 0, %s76
      %s78 = sphi 0, %s76
      %s79 = sphi 0, %s78
      %s93 = sphi 0, %s79
      %s97 = sphi 0, %s97
      %s99 = sphi 0, %s97
      %s100 = sphi 0, %s99
      %s114 = sphi 0, %s100
      %s118 = sphi 0, %s118
      %s120 = sphi 0, %s118
      %s121 = sphi 0, %s120
      %s135 = sphi 0, %s121
      %s139 = sphi 0, %s139
      %s141 = sphi 0, %s139
      %s142 = sphi 0, %s141
      %s156 = sphi 0, %s142
      %s160 = sphi 0, %s160
      %s162 = sphi 0, %s160
      %s163 = sphi 0, %s162
      %s177 = sphi 0, %s163
      %s183 = sphi 0, %s185
      %s186 = sphi 0, %s183
      %s187 = sphi 0, %s186
      %s203 = sphi 0, %s187
    $region4: #{tpu_custom_call.1} parent=1 // loop_header_branch
      %24 = sbr.rel (%p22) target = $region8
    $region5: #{tpu_custom_call.1} parent=1 // loop_body
      %s26 = ssub.s32 %s21, 1
      %s27 = ssub.s32 %s21, 2
      %s28 = sadd.s32 %s21, 1
      %s29 = ssub.s32 %s21, %s28
      %p30 = scmp.eq.s32.totalorder %s29, 0
      %s32 = sadd.s32 %s31, 1
      %s33 = scalar_select %p30, %s31, %s32
      %p36 = pneg %p30
      %p37 = scmp.eq.s32.totalorder %s21, 1
      %p38 = por %p36, %p37
      %p39 = scmp.ne.s32.totalorder %s31, %s34
      %p40 = scmp.eq.s32.totalorder %s21, 0
      %p41 = por %p39, %p40
      %p42 = scmp.ne.s32.totalorder %s31, %s34
      %p43 = scmp.eq.s32.totalorder %s26, 1
      %p44 = por %p42, %p43
      %p45 = scmp.ne.s32.totalorder %s34, %s35
      %p46 = scmp.eq.s32.totalorder %s26, 0
      %p47 = por %p45, %p46
      %p48 = scmp.ne.s32.totalorder %s34, %s35
      %p49 = scmp.eq.s32.totalorder %s27, 1
      %p50 = por %p48, %p49
      %p52 = scmp.ne.s32.totalorder %s35, %s51
      %p53 = scmp.eq.s32.totalorder %s27, 0
      %p54 = por %p52, %p53
      %s56 = sadd.s32 %s55, 1
      %p59 = scmp.eq.s32.totalorder %s21, 1
      %p60 = scmp.ne.s32.totalorder %s55, %s57
      %p61 = scmp.eq.s32.totalorder %s21, 0
      %p62 = por %p60, %p61
      %p63 = scmp.ne.s32.totalorder %s55, %s57
      %p64 = scmp.eq.s32.totalorder %s26, 1
      %p65 = por %p63, %p64
      %p66 = scmp.ne.s32.totalorder %s57, %s58
      %p67 = scmp.eq.s32.totalorder %s26, 0
      %p68 = por %p66, %p67
      %p69 = scmp.ne.s32.totalorder %s57, %s58
      %p70 = scmp.eq.s32.totalorder %s27, 1
      %p71 = por %p69, %p70
      %p73 = scmp.ne.s32.totalorder %s58, %s72
      %p74 = scmp.eq.s32.totalorder %s27, 0
      %p75 = por %p73, %p74
      %s77 = sadd.s32 %s76, 1
      %p80 = scmp.eq.s32.totalorder %s21, 1
      %p81 = scmp.ne.s32.totalorder %s76, %s78
      %p82 = scmp.eq.s32.totalorder %s21, 0
      %p83 = por %p81, %p82
      %p84 = scmp.ne.s32.totalorder %s76, %s78
      %p85 = scmp.eq.s32.totalorder %s26, 1
      %p86 = por %p84, %p85
      %p87 = scmp.ne.s32.totalorder %s78, %s79
      %p88 = scmp.eq.s32.totalorder %s26, 0
      %p89 = por %p87, %p88
      %p90 = scmp.ne.s32.totalorder %s78, %s79
      %p91 = scmp.eq.s32.totalorder %s27, 1
      %p92 = por %p90, %p91
      %p94 = scmp.ne.s32.totalorder %s79, %s93
      %p95 = scmp.eq.s32.totalorder %s27, 0
      %p96 = por %p94, %p95
      %s98 = sadd.s32 %s97, 1
      %p101 = scmp.eq.s32.totalorder %s21, 1
      %p102 = scmp.ne.s32.totalorder %s97, %s99
      %p103 = scmp.eq.s32.totalorder %s21, 0
      %p104 = por %p102, %p103
      %p105 = scmp.ne.s32.totalorder %s97, %s99
      %p106 = scmp.eq.s32.totalorder %s26, 1
      %p107 = por %p105, %p106
      %p108 = scmp.ne.s32.totalorder %s99, %s100
      %p109 = scmp.eq.s32.totalorder %s26, 0
      %p110 = por %p108, %p109
      %p111 = scmp.ne.s32.totalorder %s99, %s100
      %p112 = scmp.eq.s32.totalorder %s27, 1
      %p113 = por %p111, %p112
      %p115 = scmp.ne.s32.totalorder %s100, %s114
      %p116 = scmp.eq.s32.totalorder %s27, 0
      %p117 = por %p115, %p116
      %s119 = sadd.s32 %s118, 1
      %p122 = scmp.eq.s32.totalorder %s21, 1
      %p123 = scmp.ne.s32.totalorder %s118, %s120
      %p124 = scmp.eq.s32.totalorder %s21, 0
      %p125 = por %p123, %p124
      %p126 = scmp.ne.s32.totalorder %s118, %s120
      %p127 = scmp.eq.s32.totalorder %s26, 1
      %p128 = por %p126, %p127
      %p129 = scmp.ne.s32.totalorder %s120, %s121
      %p130 = scmp.eq.s32.totalorder %s26, 0
      %p131 = por %p129, %p130
      %p132 = scmp.ne.s32.totalorder %s120, %s121
      %p133 = scmp.eq.s32.totalorder %s27, 1
      %p134 = por %p132, %p133
      %p136 = scmp.ne.s32.totalorder %s121, %s135
      %p137 = scmp.eq.s32.totalorder %s27, 0
      %p138 = por %p136, %p137
      %s140 = sadd.s32 %s139, 1
      %p143 = scmp.eq.s32.totalorder %s21, 1
      %p144 = scmp.ne.s32.totalorder %s139, %s141
      %p145 = scmp.eq.s32.totalorder %s21, 0
      %p146 = por %p144, %p145
      %p147 = scmp.ne.s32.totalorder %s139, %s141
      %p148 = scmp.eq.s32.totalorder %s26, 1
      %p149 = por %p147, %p148
      %p150 = scmp.ne.s32.totalorder %s141, %s142
      %p151 = scmp.eq.s32.totalorder %s26, 0
      %p152 = por %p150, %p151
      %p153 = scmp.ne.s32.totalorder %s141, %s142
      %p154 = scmp.eq.s32.totalorder %s27, 1
      %p155 = por %p153, %p154
      %p157 = scmp.ne.s32.totalorder %s142, %s156
      %p158 = scmp.eq.s32.totalorder %s27, 0
      %p159 = por %p157, %p158
      %s161 = sadd.s32 %s160, 1
      %p164 = scmp.eq.s32.totalorder %s21, 1
      %p165 = scmp.ne.s32.totalorder %s160, %s162
      %p166 = scmp.eq.s32.totalorder %s21, 0
      %p167 = por %p165, %p166
      %p168 = scmp.ne.s32.totalorder %s160, %s162
      %p169 = scmp.eq.s32.totalorder %s26, 1
      %p170 = por %p168, %p169
      %p171 = scmp.ne.s32.totalorder %s162, %s163
      %p172 = scmp.eq.s32.totalorder %s26, 0
      %p173 = por %p171, %p172
      %p174 = scmp.ne.s32.totalorder %s162, %s163
      %p175 = scmp.eq.s32.totalorder %s27, 1
      %p176 = por %p174, %p175
      %p178 = scmp.ne.s32.totalorder %s163, %s177
      %p179 = scmp.eq.s32.totalorder %s27, 0
      %p180 = por %p178, %p179
      %s181 = ssub.s32 %s21, %s28
      %p182 = scmp.eq.s32.totalorder %s181, 0
      %s184 = sadd.s32 %s183, 1
      %s185 = scalar_select %p182, %s183, %s184
      %p188 = pneg %p182
      %p189 = scmp.eq.s32.totalorder %s21, 1
      %p190 = por %p188, %p189
      %p191 = scmp.ne.s32.totalorder %s183, %s186
      %p192 = scmp.eq.s32.totalorder %s21, 0
      %p193 = por %p191, %p192
      %p194 = scmp.ne.s32.totalorder %s183, %s186
      %p195 = scmp.eq.s32.totalorder %s26, 1
      %p196 = por %p194, %p195
      %p197 = scmp.ne.s32.totalorder %s186, %s187
      %p198 = scmp.eq.s32.totalorder %s26, 0
      %p199 = por %p197, %p198
      %p200 = scmp.ne.s32.totalorder %s186, %s187
      %p201 = scmp.eq.s32.totalorder %s27, 1
      %p202 = por %p200, %p201
      %p204 = scmp.ne.s32.totalorder %s187, %s203
      %p205 = scmp.eq.s32.totalorder %s27, 0
      %p206 = por %p204, %p205
      %p207 = scmp.le.s32.totalorder 1, %s21
      %p208 = scmp.lt.s32.totalorder %s21, 3
      %p209 = pnand %p207, %p208
      %p210 = pneg %p209
      // Predicated region
      $region9: #{tpu_custom_call.1} parent=5 // pred_check
        _
      $region10: #{tpu_custom_call.1} parent=5 // pred_check_branch
        %212 = sbr.rel (%p209) target = $region12
      $region11: #{tpu_custom_call.1} parent=5 // pred_region
        %s213 = ssub.s32 %s21, 1
        // Predicated region
        $region13: #{tpu_custom_call.1} parent=11 // pred_check
          %p214 = pneg %p68
        $region14: #{tpu_custom_call.1} parent=11 // pred_check_branch
          %216 = sbr.rel (%p214) target = $region16
        $region15: #{tpu_custom_call.1} parent=11 // pred_region
          %s218 = ssub.s32 128, 128
          %219 = vsyncadd [#allocation6], %s218
          %s221 = sshll.u32 [#allocation5], 4
          %s222 = int_to_ptr.vmem [resolvable:$true] %s221
          %224 = dma.hbm_to_vmem [thread:$0]  %s1, 128, %s222, [#allocation6]
        $region16: #{tpu_custom_call.1} parent=11 // pred_fallthru
          _
        // Predicated region
        $region17: #{tpu_custom_call.1} parent=11 // pred_check
          %p225 = pneg %p89
        $region18: #{tpu_custom_call.1} parent=11 // pred_check_branch
          %227 = sbr.rel (%p225) target = $region20
        $region19: #{tpu_custom_call.1} parent=11 // pred_region
          %s229 = ssub.s32 256, 256
          %230 = vsyncadd [#allocation6], %s229
          %s231 = sshll.u32 [#allocation7], 4
          %s232 = int_to_ptr.vmem [resolvable:$true] %s231
          %237 = dma.hbm_to_vmem [thread:$0]  %s2, 256, %s232, [#allocation6], 64, 64, 4
        $region20: #{tpu_custom_call.1} parent=11 // pred_fallthru
          _
        // Predicated region
        $region21: #{tpu_custom_call.1} parent=11 // pred_check
          %p238 = pneg %p110
        $region22: #{tpu_custom_call.1} parent=11 // pred_check_branch
          %240 = sbr.rel (%p238) target = $region24
        $region23: #{tpu_custom_call.1} parent=11 // pred_region
          %s242 = ssub.s32 256, 256
          %243 = vsyncadd [#allocation9], %s242
          %s244 = sshll.u32 [#allocation8], 4
          %s245 = int_to_ptr.vmem [resolvable:$true] %s244
          %250 = dma.hbm_to_vmem [thread:$0]  %s3, 256, %s245, [#allocation9], 64, 64, 4
        $region24: #{tpu_custom_call.1} parent=11 // pred_fallthru
          _
        // Predicated region
        $region25: #{tpu_custom_call.1} parent=11 // pred_check
          %p251 = pneg %p131
        $region26: #{tpu_custom_call.1} parent=11 // pred_check_branch
          %253 = sbr.rel (%p251) target = $region28
        $region27: #{tpu_custom_call.1} parent=11 // pred_region
          %s255 = ssub.s32 256, 256
          %256 = vsyncadd [#allocation9], %s255
          %s257 = sshll.u32 [#allocation10], 4
          %s258 = int_to_ptr.vmem [resolvable:$true] %s257
          %263 = dma.hbm_to_vmem [thread:$0]  %s4, 256, %s258, [#allocation9], 64, 64, 4
        $region28: #{tpu_custom_call.1} parent=11 // pred_fallthru
          _
        // Predicated region
        $region29: #{tpu_custom_call.1} parent=11 // pred_check
          %p264 = pneg %p152
        $region30: #{tpu_custom_call.1} parent=11 // pred_check_branch
          %266 = sbr.rel (%p264) target = $region32
        $region31: #{tpu_custom_call.1} parent=11 // pred_region
          _
        $region32: #{tpu_custom_call.1} parent=11 // pred_fallthru
          _
        // Predicated region
        $region33: #{tpu_custom_call.1} parent=11 // pred_check
          %p267 = pneg %p173
        $region34: #{tpu_custom_call.1} parent=11 // pred_check_branch
          %269 = sbr.rel (%p267) target = $region36
        $region35: #{tpu_custom_call.1} parent=11 // pred_region
          _
        $region36: #{tpu_custom_call.1} parent=11 // pred_fallthru
          _
      $region12: #{tpu_custom_call.1} parent=5 // pred_fallthru
        _
      %p270 = scmp.lt.s32.totalorder %s21, 2
      // Predicated region
      $region37: #{tpu_custom_call.1} parent=5 // pred_check
        %p271 = pneg %p270
      $region38: #{tpu_custom_call.1} parent=5 // pred_check_branch
        %273 = sbr.rel (%p271) target = $region40
      $region39: #{tpu_custom_call.1} parent=5 // pred_region
        // Predicated region
        $region41: #{tpu_custom_call.1} parent=39 // pred_check
          %p274 = pneg %p41
        $region42: #{tpu_custom_call.1} parent=39 // pred_check_branch
          %276 = sbr.rel (%p274) target = $region44
        $region43: #{tpu_custom_call.1} parent=39 // pred_region
          %s277 = sand.u32 %s31, 1
          %s278 = scalar_lea.sflag [#allocation3], %s277
          %s279 = sand.u32 %s31, 1
          %s280 = smul.addr %s279, 16
          %s281 = scalar_lea.vmem [#allocation2], %s280
          %s282 = smul.u32 2, %s21
          %s284 = ssub.s32 256, 256
          %285 = vsyncadd %s278, %s284
          %s286 = smul.addr %s282, 128
          %s287 = scalar_lea.hbm %s0, %s286
          %s288 = sshll.u32 %s281, 4
          %s289 = int_to_ptr.vmem [resolvable:$true] %s288
          %294 = dma.hbm_to_vmem [thread:$0]  %s287, 256, %s289, %s278, 128, 128, 8
        $region44: #{tpu_custom_call.1} parent=39 // pred_fallthru
          _
      $region40: #{tpu_custom_call.1} parent=5 // pred_fallthru
        _
      %p295 = scmp.le.s32.totalorder 1, %s21
      %p296 = scmp.lt.s32.totalorder %s21, 3
      %p297 = pnand %p295, %p296
      %p298 = pneg %p297
      // Predicated region
      $region45: #{tpu_custom_call.1} parent=5 // pred_check
        _
      $region46: #{tpu_custom_call.1} parent=5 // pred_check_branch
        %300 = sbr.rel (%p297) target = $region48
      $region47: #{tpu_custom_call.1} parent=5 // pred_region
        %s301 = ssub.s32 %s21, 1
        %s302 = sand.u32 %s34, 1
        %s303 = scalar_lea.sflag [#allocation3], %s302
        %s304 = sand.u32 %s34, 1
        %s305 = smul.addr %s304, 16
        %s306 = scalar_lea.vmem [#allocation2], %s305
        // Predicated region
        $region49: #{tpu_custom_call.1} parent=47 // pred_check
          %p307 = pneg %p47
        $region50: #{tpu_custom_call.1} parent=47 // pred_check_branch
          %309 = sbr.rel (%p307) target = $region52
        $region51: #{tpu_custom_call.1} parent=47 // pred_region
          %310 = dma.done %s303, 256
        $region52: #{tpu_custom_call.1} parent=47 // pred_fallthru
          _
        // Predicated region
        $region53: #{tpu_custom_call.1} parent=47 // pred_check
          %p311 = pneg %p68
        $region54: #{tpu_custom_call.1} parent=47 // pred_check_branch
          %313 = sbr.rel (%p311) target = $region56
        $region55: #{tpu_custom_call.1} parent=47 // pred_region
          %314 = dma.done [#allocation6], 128
        $region56: #{tpu_custom_call.1} parent=47 // pred_fallthru
          _
        // Predicated region
        $region57: #{tpu_custom_call.1} parent=47 // pred_check
          %p315 = pneg %p89
        $region58: #{tpu_custom_call.1} parent=47 // pred_check_branch
          %317 = sbr.rel (%p315) target = $region60
        $region59: #{tpu_custom_call.1} parent=47 // pred_region
          %318 = dma.done [#allocation6], 256
        $region60: #{tpu_custom_call.1} parent=47 // pred_fallthru
          _
        // Predicated region
        $region61: #{tpu_custom_call.1} parent=47 // pred_check
          %p319 = pneg %p110
        $region62: #{tpu_custom_call.1} parent=47 // pred_check_branch
          %321 = sbr.rel (%p319) target = $region64
        $region63: #{tpu_custom_call.1} parent=47 // pred_region
          %322 = dma.done [#allocation9], 256
        $region64: #{tpu_custom_call.1} parent=47 // pred_fallthru
          _
        // Predicated region
        $region65: #{tpu_custom_call.1} parent=47 // pred_check
          %p323 = pneg %p131
        $region66: #{tpu_custom_call.1} parent=47 // pred_check_branch
          %325 = sbr.rel (%p323) target = $region68
        $region67: #{tpu_custom_call.1} parent=47 // pred_region
          %326 = dma.done [#allocation9], 256
        $region68: #{tpu_custom_call.1} parent=47 // pred_fallthru
          _
        %s327 = sand.u32 %s34, 1
        %s328 = scalar_lea.sflag [#allocation3], %s327
        %s329 = sand.u32 %s34, 1
        %s330 = smul.addr %s329, 16
        %s331 = scalar_lea.vmem [#allocation2], %s330
        %p332 = pneg %p47
        %p333 = pneg %p44
        %p334 = pneg %p68
        %p335 = pneg %p65
        %p336 = pneg %p89
        %p337 = pneg %p86
        %p338 = pneg %p110
        %p339 = pneg %p107
        %p340 = pneg %p131
        %p341 = pneg %p128
        %p342 = pneg %p152
        %p343 = pneg %p149
        %p344 = pneg %p173
        %p345 = pneg %p170
        %p346 = pneg %p199
        %p347 = pneg %p196
        %s348 = sand.u32 %s186, 1
        %s349 = scalar_lea.sflag [#allocation4], %s348
        %s350 = sand.u32 %s186, 1
        %s351 = smul.addr %s350, 8
        %s352 = scalar_lea.vmem [#allocation11], %s351
        %s353 = smul.u32 2, %s26
        %v355 = vld [vmem:[%s306] sm:$0xff]
        %v356 = vld [vmem:[%s306 + $0x8] sm:$0xff]
        %v357 = vpack.c.bf16 %v356, %v355
        %v358 = vpack.c.bf16 %v356, %v356
        %v359 = vld [vmem:[#allocation7] sm:$0xf]
        %v360 = vld [vmem:[#allocation7 + $0x4] sm:$0xf]
        %v361 = vld [vmem:[#allocation7 + $0x8] sm:$0xf]
        %v362 = vld [vmem:[#allocation7 + $0xc] sm:$0xf]
        %v363 = vld [vmem:[#allocation8] sm:$0xf]
        %v364 = vld [vmem:[#allocation8 + $0x4] sm:$0xf]
        %v365 = vld [vmem:[#allocation8 + $0x8] sm:$0xf]
        %v366 = vld [vmem:[#allocation8 + $0xc] sm:$0xf]
        %v367 = vld [vmem:[#allocation10] sm:$0xf]
        %v368 = vld [vmem:[#allocation10 + $0x4] sm:$0xf]
        %v369 = vld [vmem:[#allocation10 + $0x8] sm:$0xf]
        %v370 = vld [vmem:[#allocation10 + $0xc] sm:$0xf]
        %v371 = vld [vmem:[%s5] sm:$0x1]
        %v372 = vld [vmem:[%s6] sm:$0x1]
        %v373 = vld [vmem:[#allocation5] sm:$0xff]
        %v378 = vunpack.c.l.b16 %v359
        %v379 = vunpack.c.l.b16 %v360
        %v380 = vunpack.c.l.b16 %v361
        %v381 = vunpack.c.l.b16 %v362
        %v382 = vpack.c.b16 %v379, %v378
        %v383 = vpack.c.b16 %v381, %v380
        %vm386 = vcmask 261120
        %v388 = vsel %vm386, %v358, 0
        %390 = vmatprep.subr.bf16.mxu0 0
        %391 = vmatpush1.bf16.msra.mxu0 %v382
        %392 = vmatprep.subr.bf16.mxu0 0
        %393 = vmatpush1.bf16.msra.mxu0 %v383
        %394 = vmatprep.subr.bf16.mxu0 0
        %395 = vmatpush1.bf16.msra.mxu0 0
        %396 = vmatprep.subr.bf16.mxu0 0
        %397 = vmatpush1.bf16.msra.mxu0 0
        %398 = vmatprep.subr.bf16.mxu0 0
        %399 = vmatpush1.bf16.msra.mxu0 0
        %400 = vmatprep.subr.bf16.mxu0 0
        %401 = vmatpush1.bf16.msra.mxu0 0
        %402 = vmatprep.subr.bf16.mxu0 0
        %403 = vmatpush1.bf16.msra.mxu0 0
        %404 = vmatprep.subr.bf16.mxu0 0
        %405 = vmatpush1.bf16.msra.mxu0 0
        %406 = vmatprep.subr.bf16.mxu0 0
        %407 = vmatpush1.bf16.msra.mxu0 0
        %408 = vmatprep.subr.bf16.mxu0 0
        %409 = vmatpush1.bf16.msra.mxu0 0
        %410 = vmatprep.subr.bf16.mxu0 0
        %411 = vmatpush1.bf16.msra.mxu0 0
        %412 = vmatprep.subr.bf16.mxu0 0
        %413 = vmatpush1.bf16.msra.mxu0 0
        %414 = vmatprep.subr.bf16.mxu0 0
        %415 = vmatpush1.bf16.msra.mxu0 0
        %416 = vmatprep.subr.bf16.mxu0 0
        %417 = vmatpush1.bf16.msra.mxu0 0
        %418 = vmatprep.subr.bf16.mxu0 0
        %419 = vmatpush1.bf16.msra.mxu0 0
        %420 = vmatprep.subr.bf16.mxu0 0
        %421 = vmatpush1.bf16.msra.mxu0 0
        %422 = vmatprep.mubr.bf16.mxu0 0
        %423 = vmatmul.mubr.bf16.gmra.mrb[0].mxu0 %v388
        %v424 = vpop.f32.mrb[0].mxu0
        %v425 = vadd.f32 0.0, %v424
        %v426 = vpop.f32.mrb[0].mxu0
        %v427 = vpop.f32.mrb[0].mxu0
        %v428 = vpop.f32.mrb[0].mxu0
        %429 = vdwg.mxu0
        %v430 = vpack.c.bf16 %v425, %v425
        %v435 = vunpack.c.l.b16 %v363
        %v436 = vunpack.c.l.b16 %v364
        %v437 = vunpack.c.l.b16 %v365
        %v438 = vunpack.c.l.b16 %v366
        %v439 = vpack.c.b16 %v436, %v435
        %v440 = vpack.c.b16 %v438, %v437
        %v444 = vsel %vm386, %v357, 0
        %446 = vmatprep.subr.bf16.mxu0 0
        %447 = vmatpush1.bf16.msra.mxu0 %v439
        %448 = vmatprep.subr.bf16.mxu0 0
        %449 = vmatpush1.bf16.msra.mxu0 %v440
        %450 = vmatprep.subr.bf16.mxu0 0
        %451 = vmatpush1.bf16.msra.mxu0 0
        %452 = vmatprep.subr.bf16.mxu0 0
        %453 = vmatpush1.bf16.msra.mxu0 0
        %454 = vmatprep.subr.bf16.mxu0 0
        %455 = vmatpush1.bf16.msra.mxu0 0
        %456 = vmatprep.subr.bf16.mxu0 0
        %457 = vmatpush1.bf16.msra.mxu0 0
        %458 = vmatprep.subr.bf16.mxu0 0
        %459 = vmatpush1.bf16.msra.mxu0 0
        %460 = vmatprep.subr.bf16.mxu0 0
        %461 = vmatpush1.bf16.msra.mxu0 0
        %462 = vmatprep.subr.bf16.mxu0 0
        %463 = vmatpush1.bf16.msra.mxu0 0
        %464 = vmatprep.subr.bf16.mxu0 0
        %465 = vmatpush1.bf16.msra.mxu0 0
        %466 = vmatprep.subr.bf16.mxu0 0
        %467 = vmatpush1.bf16.msra.mxu0 0
        %468 = vmatprep.subr.bf16.mxu0 0
        %469 = vmatpush1.bf16.msra.mxu0 0
        %470 = vmatprep.subr.bf16.mxu0 0
        %471 = vmatpush1.bf16.msra.mxu0 0
        %472 = vmatprep.subr.bf16.mxu0 0
        %473 = vmatpush1.bf16.msra.mxu0 0
        %474 = vmatprep.subr.bf16.mxu0 0
        %475 = vmatpush1.bf16.msra.mxu0 0
        %476 = vmatprep.subr.bf16.mxu0 0
        %477 = vmatpush1.bf16.msra.mxu0 0
        %478 = vmatprep.mubr.bf16.mxu0 0
        %479 = vmatmul.mubr.bf16.gmra.mrb[0].mxu0 %v444
        %v480 = vpop.f32.mrb[0].mxu0
        %v481 = vadd.f32 0.0, %v480
        %v482 = vpop.f32.mrb[0].mxu0
        %v483 = vpop.f32.mrb[0].mxu0
        %v484 = vadd.f32 0.0, %v483
        %v485 = vpop.f32.mrb[0].mxu0
        %486 = vdwg.mxu0
        %v487 = vpack.c.bf16 %v484, %v481
        %489 = vrot.lane.b32.xlu0 %v430, 120
        %v490 = vpop.permute.xlu0 %489
        %491 = vrot.lane.b32.xlu0 %v430, 112
        %v492 = vpop.permute.xlu0 %491
        %493 = vrot.lane.b32.xlu0 %v430, 104
        %v494 = vpop.permute.xlu0 %493
        %v496 = vunpack.c.l.s4 1983009808
        %v497 = vunpack.c.0.s8 %v496
        %v498 = vlaneseq
        %v499 = vshrl.u32 %v498, 7
        %v500 = vsub.s32 %v497, %v499
        %v501 = vrot.slane %v430, %v500
        %v504 = vunpack.c.l.s4 1983009808
        %v505 = vunpack.c.0.s8 %v504
        %v506 = vlaneseq
        %v507 = vshrl.u32 %v506, 7
        %v508 = vsub.s32 %v505, %v507
        %v509 = vrot.slane %v492, %v508
        %v510 = vcombine.low %v501, %v509
        %v511 = vcombine.high %v501, %v509
        %v513 = vunpack.c.l.s4 1934713408
        %v514 = vunpack.c.0.s8 %v513
        %v515 = vlaneseq
        %v516 = vshrl.u32 %v515, 7
        %v517 = vsub.s32 %v514, %v516
        %v518 = vrot.slane %v510, %v517
        %v520 = vunpack.c.l.s4 1934713408
        %v521 = vunpack.c.0.s8 %v520
        %v522 = vlaneseq
        %v523 = vshrl.u32 %v522, 7
        %v524 = vsub.s32 %v521, %v523
        %v525 = vrot.slane %v511, %v524
        %v526 = vcombine.high %v518, 0
        %v527 = vcombine.high %v525, 0
        %v530 = vunpack.c.l.s4 1983009808
        %v531 = vunpack.c.0.s8 %v530
        %v532 = vlaneseq
        %v533 = vshrl.u32 %v532, 7
        %v534 = vsub.s32 %v531, %v533
        %v535 = vrot.slane %v490, %v534
        %v538 = vunpack.c.l.s4 1983009808
        %v539 = vunpack.c.0.s8 %v538
        %v540 = vlaneseq
        %v541 = vshrl.u32 %v540, 7
        %v542 = vsub.s32 %v539, %v541
        %v543 = vrot.slane %v494, %v542
        %v544 = vcombine.low %v535, %v543
        %v545 = vcombine.high %v535, %v543
        %v547 = vunpack.c.l.s4 1934713408
        %v548 = vunpack.c.0.s8 %v547
        %v549 = vlaneseq
        %v550 = vshrl.u32 %v549, 7
        %v551 = vsub.s32 %v548, %v550
        %v552 = vrot.slane %v544, %v551
        %v554 = vunpack.c.l.s4 1934713408
        %v555 = vunpack.c.0.s8 %v554
        %v556 = vlaneseq
        %v557 = vshrl.u32 %v556, 7
        %v558 = vsub.s32 %v555, %v557
        %v559 = vrot.slane %v545, %v558
        %v560 = vcombine.high %v552, 0
        %v561 = vcombine.high %v559, 0
        %v564 = vpack.i.b16 %v552, %v518
        %v566 = vshrl.u32 %v518, 16
        %v567 = vshrl.u32 %v552, 16
        %v568 = vpack.i.b16 %v567, %v566
        %v572 = vpack.i.b16 %v560, %v526
        %v574 = vshrl.u32 %v526, 16
        %v575 = vshrl.u32 %v560, 16
        %v576 = vpack.i.b16 %v575, %v574
        %v580 = vpack.i.b16 %v559, %v525
        %v582 = vshrl.u32 %v525, 16
        %v583 = vshrl.u32 %v559, 16
        %v584 = vpack.i.b16 %v583, %v582
        %v588 = vpack.i.b16 %v561, %v527
        %v590 = vshrl.u32 %v527, 16
        %v591 = vshrl.u32 %v561, 16
        %v592 = vpack.i.b16 %v591, %v590
        %v594 = vcombine.low %v564, %v580
        %v596 = vunpack.c.l.s4 1983009808
        %v597 = vunpack.c.0.s8 %v596
        %v598 = vlaneseq
        %v599 = vshrl.u32 %v598, 7
        %v600 = vsub.s32 %v597, %v599
        %v601 = vrot.slane %v594, %v600
        %v602 = vcombine.low %v572, %v588
        %v604 = vunpack.c.l.s4 1983009808
        %v605 = vunpack.c.0.s8 %v604
        %v606 = vlaneseq
        %v607 = vshrl.u32 %v606, 7
        %v608 = vsub.s32 %v605, %v607
        %v609 = vrot.slane %v602, %v608
        %v610 = vcombine.low %v601, %v609
        %v612 = vunpack.c.l.s4 1934713408
        %v613 = vunpack.c.0.s8 %v612
        %v614 = vlaneseq
        %v615 = vshrl.u32 %v614, 7
        %v616 = vsub.s32 %v613, %v615
        %v617 = vrot.slane %v610, %v616
        %v618 = vcombine.high %v617, 0
        %v619 = vcombine.low %v568, %v584
        %v621 = vunpack.c.l.s4 1983009808
        %v622 = vunpack.c.0.s8 %v621
        %v623 = vlaneseq
        %v624 = vshrl.u32 %v623, 7
        %v625 = vsub.s32 %v622, %v624
        %v626 = vrot.slane %v619, %v625
        %v627 = vcombine.low %v576, %v592
        %v629 = vunpack.c.l.s4 1983009808
        %v630 = vunpack.c.0.s8 %v629
        %v631 = vlaneseq
        %v632 = vshrl.u32 %v631, 7
        %v633 = vsub.s32 %v630, %v632
        %v634 = vrot.slane %v627, %v633
        %v635 = vcombine.low %v626, %v634
        %v637 = vunpack.c.l.s4 1934713408
        %v638 = vunpack.c.0.s8 %v637
        %v639 = vlaneseq
        %v640 = vshrl.u32 %v639, 7
        %v641 = vsub.s32 %v638, %v640
        %v642 = vrot.slane %v635, %v641
        %v643 = vcombine.high %v642, 0
        %v646 = vpack.i.b16 %v642, %v617
        %v647 = vshrl.u32 %v617, 16
        %v648 = vshrl.u32 %v642, 16
        %v649 = vpack.i.b16 %v648, %v647
        %v652 = vpack.i.b16 %v643, %v618
        %v653 = vshrl.u32 %v618, 16
        %v654 = vshrl.u32 %v643, 16
        %v655 = vpack.i.b16 %v654, %v653
        %657 = vrot.lane.b32.xlu0 %v487, 120
        %v658 = vpop.permute.xlu0 %657
        %659 = vrot.lane.b32.xlu0 %v487, 112
        %v660 = vpop.permute.xlu0 %659
        %661 = vrot.lane.b32.xlu0 %v487, 104
        %v662 = vpop.permute.xlu0 %661
        %v665 = vpack.i.b16 %v658, %v487
        %v667 = vshrl.u32 %v487, 16
        %v668 = vshrl.u32 %v658, 16
        %v669 = vpack.i.b16 %v668, %v667
        %v673 = vpack.i.b16 %v662, %v660
        %v675 = vshrl.u32 %v660, 16
        %v676 = vshrl.u32 %v662, 16
        %v677 = vpack.i.b16 %v676, %v675
        %v680 = vpack.i.b16 0, 0
        %v682 = vshrl.u32 0, 16
        %v683 = vpack.i.b16 %v682, %v682
        %v685 = vcombine.high %v665, %v680
        %v687 = vunpack.c.l.s4 1983009808
        %v688 = vunpack.c.0.s8 %v687
        %v689 = vlaneseq
        %v690 = vshrl.u32 %v689, 7
        %v691 = vsub.s32 %v688, %v690
        %v692 = vrot.slane %v665, %v691
        %v694 = vunpack.c.l.s4 1983009808
        %v695 = vunpack.c.0.s8 %v694
        %v696 = vlaneseq
        %v697 = vshrl.u32 %v696, 7
        %v698 = vsub.s32 %v695, %v697
        %v699 = vrot.slane %v685, %v698
        %v700 = vcombine.high %v673, %v680
        %v702 = vunpack.c.l.s4 1983009808
        %v703 = vunpack.c.0.s8 %v702
        %v704 = vlaneseq
        %v705 = vshrl.u32 %v704, 7
        %v706 = vsub.s32 %v703, %v705
        %v707 = vrot.slane %v673, %v706
        %v709 = vunpack.c.l.s4 1983009808
        %v710 = vunpack.c.0.s8 %v709
        %v711 = vlaneseq
        %v712 = vshrl.u32 %v711, 7
        %v713 = vsub.s32 %v710, %v712
        %v714 = vrot.slane %v700, %v713
        %v715 = vcombine.low %v692, %v707
        %v716 = vcombine.high %v692, %v707
        %v718 = vunpack.c.l.s4 1934713408
        %v719 = vunpack.c.0.s8 %v718
        %v720 = vlaneseq
        %v721 = vshrl.u32 %v720, 7
        %v722 = vsub.s32 %v719, %v721
        %v723 = vrot.slane %v715, %v722
        %v725 = vunpack.c.l.s4 1934713408
        %v726 = vunpack.c.0.s8 %v725
        %v727 = vlaneseq
        %v728 = vshrl.u32 %v727, 7
        %v729 = vsub.s32 %v726, %v728
        %v730 = vrot.slane %v716, %v729
        %v731 = vcombine.low %v699, %v714
        %v732 = vcombine.high %v699, %v714
        %v734 = vunpack.c.l.s4 1934713408
        %v735 = vunpack.c.0.s8 %v734
        %v736 = vlaneseq
        %v737 = vshrl.u32 %v736, 7
        %v738 = vsub.s32 %v735, %v737
        %v739 = vrot.slane %v731, %v738
        %v741 = vunpack.c.l.s4 1934713408
        %v742 = vunpack.c.0.s8 %v741
        %v743 = vlaneseq
        %v744 = vshrl.u32 %v743, 7
        %v745 = vsub.s32 %v742, %v744
        %v746 = vrot.slane %v732, %v745
        %v747 = vcombine.high %v723, 0
        %v748 = vcombine.high %v730, 0
        %v749 = vcombine.high %v739, 0
        %v750 = vcombine.high %v746, 0
        %v751 = vcombine.high %v669, %v683
        %v753 = vunpack.c.l.s4 1983009808
        %v754 = vunpack.c.0.s8 %v753
        %v755 = vlaneseq
        %v756 = vshrl.u32 %v755, 7
        %v757 = vsub.s32 %v754, %v756
        %v758 = vrot.slane %v669, %v757
        %v760 = vunpack.c.l.s4 1983009808
        %v761 = vunpack.c.0.s8 %v760
        %v762 = vlaneseq
        %v763 = vshrl.u32 %v762, 7
        %v764 = vsub.s32 %v761, %v763
        %v765 = vrot.slane %v751, %v764
        %v766 = vcombine.high %v677, %v683
        %v768 = vunpack.c.l.s4 1983009808
        %v769 = vunpack.c.0.s8 %v768
        %v770 = vlaneseq
        %v771 = vshrl.u32 %v770, 7
        %v772 = vsub.s32 %v769, %v771
        %v773 = vrot.slane %v677, %v772
        %v775 = vunpack.c.l.s4 1983009808
        %v776 = vunpack.c.0.s8 %v775
        %v777 = vlaneseq
        %v778 = vshrl.u32 %v777, 7
        %v779 = vsub.s32 %v776, %v778
        %v780 = vrot.slane %v766, %v779
        %v781 = vcombine.low %v758, %v773
        %v782 = vcombine.high %v758, %v773
        %v784 = vunpack.c.l.s4 1934713408
        %v785 = vunpack.c.0.s8 %v784
        %v786 = vlaneseq
        %v787 = vshrl.u32 %v786, 7
        %v788 = vsub.s32 %v785, %v787
        %v789 = vrot.slane %v781, %v788
        %v791 = vunpack.c.l.s4 1934713408
        %v792 = vunpack.c.0.s8 %v791
        %v793 = vlaneseq
        %v794 = vshrl.u32 %v793, 7
        %v795 = vsub.s32 %v792, %v794
        %v796 = vrot.slane %v782, %v795
        %v797 = vcombine.low %v765, %v780
        %v798 = vcombine.high %v765, %v780
        %v800 = vunpack.c.l.s4 1934713408
        %v801 = vunpack.c.0.s8 %v800
        %v802 = vlaneseq
        %v803 = vshrl.u32 %v802, 7
        %v804 = vsub.s32 %v801, %v803
        %v805 = vrot.slane %v797, %v804
        %v807 = vunpack.c.l.s4 1934713408
        %v808 = vunpack.c.0.s8 %v807
        %v809 = vlaneseq
        %v810 = vshrl.u32 %v809, 7
        %v811 = vsub.s32 %v808, %v810
        %v812 = vrot.slane %v798, %v811
        %v813 = vcombine.high %v789, 0
        %v814 = vcombine.high %v796, 0
        %v815 = vcombine.high %v805, 0
        %v816 = vcombine.high %v812, 0
        %v817 = vcombine.low %v723, %v730
        %v819 = vunpack.c.l.s4 1983009808
        %v820 = vunpack.c.0.s8 %v819
        %v821 = vlaneseq
        %v822 = vshrl.u32 %v821, 7
        %v823 = vsub.s32 %v820, %v822
        %v824 = vrot.slane %v817, %v823
        %v825 = vcombine.low %v747, %v748
        %v827 = vunpack.c.l.s4 1983009808
        %v828 = vunpack.c.0.s8 %v827
        %v829 = vlaneseq
        %v830 = vshrl.u32 %v829, 7
        %v831 = vsub.s32 %v828, %v830
        %v832 = vrot.slane %v825, %v831
        %v833 = vcombine.low %v739, %v746
        %v835 = vunpack.c.l.s4 1983009808
        %v836 = vunpack.c.0.s8 %v835
        %v837 = vlaneseq
        %v838 = vshrl.u32 %v837, 7
        %v839 = vsub.s32 %v836, %v838
        %v840 = vrot.slane %v833, %v839
        %v841 = vcombine.low %v749, %v750
        %v843 = vunpack.c.l.s4 1983009808
        %v844 = vunpack.c.0.s8 %v843
        %v845 = vlaneseq
        %v846 = vshrl.u32 %v845, 7
        %v847 = vsub.s32 %v844, %v846
        %v848 = vrot.slane %v841, %v847
        %v849 = vcombine.low %v824, %v832
        %v851 = vunpack.c.l.s4 1934713408
        %v852 = vunpack.c.0.s8 %v851
        %v853 = vlaneseq
        %v854 = vshrl.u32 %v853, 7
        %v855 = vsub.s32 %v852, %v854
        %v856 = vrot.slane %v849, %v855
        %v857 = vcombine.low %v840, %v848
        %v859 = vunpack.c.l.s4 1934713408
        %v860 = vunpack.c.0.s8 %v859
        %v861 = vlaneseq
        %v862 = vshrl.u32 %v861, 7
        %v863 = vsub.s32 %v860, %v862
        %v864 = vrot.slane %v857, %v863
        %v865 = vcombine.low %v856, %v864
        %v866 = vcombine.high %v856, %v864
        %v867 = vcombine.low %v789, %v796
        %v869 = vunpack.c.l.s4 1983009808
        %v870 = vunpack.c.0.s8 %v869
        %v871 = vlaneseq
        %v872 = vshrl.u32 %v871, 7
        %v873 = vsub.s32 %v870, %v872
        %v874 = vrot.slane %v867, %v873
        %v875 = vcombine.low %v813, %v814
        %v877 = vunpack.c.l.s4 1983009808
        %v878 = vunpack.c.0.s8 %v877
        %v879 = vlaneseq
        %v880 = vshrl.u32 %v879, 7
        %v881 = vsub.s32 %v878, %v880
        %v882 = vrot.slane %v875, %v881
        %v883 = vcombine.low %v805, %v812
        %v885 = vunpack.c.l.s4 1983009808
        %v886 = vunpack.c.0.s8 %v885
        %v887 = vlaneseq
        %v888 = vshrl.u32 %v887, 7
        %v889 = vsub.s32 %v886, %v888
        %v890 = vrot.slane %v883, %v889
        %v891 = vcombine.low %v815, %v816
        %v893 = vunpack.c.l.s4 1983009808
        %v894 = vunpack.c.0.s8 %v893
        %v895 = vlaneseq
        %v896 = vshrl.u32 %v895, 7
        %v897 = vsub.s32 %v894, %v896
        %v898 = vrot.slane %v891, %v897
        %v899 = vcombine.low %v874, %v882
        %v901 = vunpack.c.l.s4 1934713408
        %v902 = vunpack.c.0.s8 %v901
        %v903 = vlaneseq
        %v904 = vshrl.u32 %v903, 7
        %v905 = vsub.s32 %v902, %v904
        %v906 = vrot.slane %v899, %v905
        %v907 = vcombine.low %v890, %v898
        %v909 = vunpack.c.l.s4 1934713408
        %v910 = vunpack.c.0.s8 %v909
        %v911 = vlaneseq
        %v912 = vshrl.u32 %v911, 7
        %v913 = vsub.s32 %v910, %v912
        %v914 = vrot.slane %v907, %v913
        %v915 = vcombine.low %v906, %v914
        %v916 = vcombine.high %v906, %v914
        %v919 = vpack.i.b16 %v915, %v865
        %v920 = vshrl.u32 %v865, 16
        %v921 = vshrl.u32 %v915, 16
        %v922 = vpack.i.b16 %v921, %v920
        %v925 = vpack.i.b16 %v916, %v866
        %v926 = vshrl.u32 %v866, 16
        %v927 = vshrl.u32 %v916, 16
        %v928 = vpack.i.b16 %v927, %v926
        %929 = vrot.lane.b32.xlu0 %v487, 96
        %v930 = vpop.permute.xlu0 %929
        %931 = vrot.lane.b32.xlu0 %v658, 96
        %v932 = vpop.permute.xlu0 %931
        %933 = vrot.lane.b32.xlu0 %v660, 96
        %v934 = vpop.permute.xlu0 %933
        %935 = vrot.lane.b32.xlu0 %v662, 96
        %v936 = vpop.permute.xlu0 %935
        %v939 = vpack.i.b16 %v932, %v930
        %v941 = vshrl.u32 %v930, 16
        %v942 = vshrl.u32 %v932, 16
        %v943 = vpack.i.b16 %v942, %v941
        %v947 = vpack.i.b16 %v936, %v934
        %v949 = vshrl.u32 %v934, 16
        %v950 = vshrl.u32 %v936, 16
        %v951 = vpack.i.b16 %v950, %v949
        %v953 = vcombine.high %v939, %v680
        %v955 = vunpack.c.l.s4 1983009808
        %v956 = vunpack.c.0.s8 %v955
        %v957 = vlaneseq
        %v958 = vshrl.u32 %v957, 7
        %v959 = vsub.s32 %v956, %v958
        %v960 = vrot.slane %v939, %v959
        %v962 = vunpack.c.l.s4 1983009808
        %v963 = vunpack.c.0.s8 %v962
        %v964 = vlaneseq
        %v965 = vshrl.u32 %v964, 7
        %v966 = vsub.s32 %v963, %v965
        %v967 = vrot.slane %v953, %v966
        %v968 = vcombine.high %v947, %v680
        %v970 = vunpack.c.l.s4 1983009808
        %v971 = vunpack.c.0.s8 %v970
        %v972 = vlaneseq
        %v973 = vshrl.u32 %v972, 7
        %v974 = vsub.s32 %v971, %v973
        %v975 = vrot.slane %v947, %v974
        %v977 = vunpack.c.l.s4 1983009808
        %v978 = vunpack.c.0.s8 %v977
        %v979 = vlaneseq
        %v980 = vshrl.u32 %v979, 7
        %v981 = vsub.s32 %v978, %v980
        %v982 = vrot.slane %v968, %v981
        %v983 = vcombine.low %v960, %v975
        %v984 = vcombine.high %v960, %v975
        %v986 = vunpack.c.l.s4 1934713408
        %v987 = vunpack.c.0.s8 %v986
        %v988 = vlaneseq
        %v989 = vshrl.u32 %v988, 7
        %v990 = vsub.s32 %v987, %v989
        %v991 = vrot.slane %v983, %v990
        %v993 = vunpack.c.l.s4 1934713408
        %v994 = vunpack.c.0.s8 %v993
        %v995 = vlaneseq
        %v996 = vshrl.u32 %v995, 7
        %v997 = vsub.s32 %v994, %v996
        %v998 = vrot.slane %v984, %v997
        %v999 = vcombine.low %v967, %v982
        %v1000 = vcombine.high %v967, %v982
        %v1002 = vunpack.c.l.s4 1934713408
        %v1003 = vunpack.c.0.s8 %v1002
        %v1004 = vlaneseq
        %v1005 = vshrl.u32 %v1004, 7
        %v1006 = vsub.s32 %v1003, %v1005
        %v1007 = vrot.slane %v999, %v1006
        %v1009 = vunpack.c.l.s4 1934713408
        %v1010 = vunpack.c.0.s8 %v1009
        %v1011 = vlaneseq
        %v1012 = vshrl.u32 %v1011, 7
        %v1013 = vsub.s32 %v1010, %v1012
        %v1014 = vrot.slane %v1000, %v1013
        %v1015 = vcombine.high %v991, 0
        %v1016 = vcombine.high %v998, 0
        %v1017 = vcombine.high %v1007, 0
        %v1018 = vcombine.high %v1014, 0
        %v1019 = vcombine.high %v943, %v683
        %v1021 = vunpack.c.l.s4 1983009808
        %v1022 = vunpack.c.0.s8 %v1021
        %v1023 = vlaneseq
        %v1024 = vshrl.u32 %v1023, 7
        %v1025 = vsub.s32 %v1022, %v1024
        %v1026 = vrot.slane %v943, %v1025
        %v1028 = vunpack.c.l.s4 1983009808
        %v1029 = vunpack.c.0.s8 %v1028
        %v1030 = vlaneseq
        %v1031 = vshrl.u32 %v1030, 7
        %v1032 = vsub.s32 %v1029, %v1031
        %v1033 = vrot.slane %v1019, %v1032
        %v1034 = vcombine.high %v951, %v683
        %v1036 = vunpack.c.l.s4 1983009808
        %v1037 = vunpack.c.0.s8 %v1036
        %v1038 = vlaneseq
        %v1039 = vshrl.u32 %v1038, 7
        %v1040 = vsub.s32 %v1037, %v1039
        %v1041 = vrot.slane %v951, %v1040
        %v1043 = vunpack.c.l.s4 1983009808
        %v1044 = vunpack.c.0.s8 %v1043
        %v1045 = vlaneseq
        %v1046 = vshrl.u32 %v1045, 7
        %v1047 = vsub.s32 %v1044, %v1046
        %v1048 = vrot.slane %v1034, %v1047
        %v1049 = vcombine.low %v1026, %v1041
        %v1050 = vcombine.high %v1026, %v1041
        %v1052 = vunpack.c.l.s4 1934713408
        %v1053 = vunpack.c.0.s8 %v1052
        %v1054 = vlaneseq
        %v1055 = vshrl.u32 %v1054, 7
        %v1056 = vsub.s32 %v1053, %v1055
        %v1057 = vrot.slane %v1049, %v1056
        %v1059 = vunpack.c.l.s4 1934713408
        %v1060 = vunpack.c.0.s8 %v1059
        %v1061 = vlaneseq
        %v1062 = vshrl.u32 %v1061, 7
        %v1063 = vsub.s32 %v1060, %v1062
        %v1064 = vrot.slane %v1050, %v1063
        %v1065 = vcombine.low %v1033, %v1048
        %v1066 = vcombine.high %v1033, %v1048
        %v1068 = vunpack.c.l.s4 1934713408
        %v1069 = vunpack.c.0.s8 %v1068
        %v1070 = vlaneseq
        %v1071 = vshrl.u32 %v1070, 7
        %v1072 = vsub.s32 %v1069, %v1071
        %v1073 = vrot.slane %v1065, %v1072
        %v1075 = vunpack.c.l.s4 1934713408
        %v1076 = vunpack.c.0.s8 %v1075
        %v1077 = vlaneseq
        %v1078 = vshrl.u32 %v1077, 7
        %v1079 = vsub.s32 %v1076, %v1078
        %v1080 = vrot.slane %v1066, %v1079
        %v1081 = vcombine.high %v1057, 0
        %v1082 = vcombine.high %v1064, 0
        %v1083 = vcombine.high %v1073, 0
        %v1084 = vcombine.high %v1080, 0
        %v1085 = vcombine.low %v991, %v998
        %v1087 = vunpack.c.l.s4 1983009808
        %v1088 = vunpack.c.0.s8 %v1087
        %v1089 = vlaneseq
        %v1090 = vshrl.u32 %v1089, 7
        %v1091 = vsub.s32 %v1088, %v1090
        %v1092 = vrot.slane %v1085, %v1091
        %v1093 = vcombine.low %v1015, %v1016
        %v1095 = vunpack.c.l.s4 1983009808
        %v1096 = vunpack.c.0.s8 %v1095
        %v1097 = vlaneseq
        %v1098 = vshrl.u32 %v1097, 7
        %v1099 = vsub.s32 %v1096, %v1098
        %v1100 = vrot.slane %v1093, %v1099
        %v1101 = vcombine.low %v1007, %v1014
        %v1103 = vunpack.c.l.s4 1983009808
        %v1104 = vunpack.c.0.s8 %v1103
        %v1105 = vlaneseq
        %v1106 = vshrl.u32 %v1105, 7
        %v1107 = vsub.s32 %v1104, %v1106
        %v1108 = vrot.slane %v1101, %v1107
        %v1109 = vcombine.low %v1017, %v1018
        %v1111 = vunpack.c.l.s4 1983009808
        %v1112 = vunpack.c.0.s8 %v1111
        %v1113 = vlaneseq
        %v1114 = vshrl.u32 %v1113, 7
        %v1115 = vsub.s32 %v1112, %v1114
        %v1116 = vrot.slane %v1109, %v1115
        %v1117 = vcombine.low %v1092, %v1100
        %v1119 = vunpack.c.l.s4 1934713408
        %v1120 = vunpack.c.0.s8 %v1119
        %v1121 = vlaneseq
        %v1122 = vshrl.u32 %v1121, 7
        %v1123 = vsub.s32 %v1120, %v1122
        %v1124 = vrot.slane %v1117, %v1123
        %v1125 = vcombine.low %v1108, %v1116
        %v1127 = vunpack.c.l.s4 1934713408
        %v1128 = vunpack.c.0.s8 %v1127
        %v1129 = vlaneseq
        %v1130 = vshrl.u32 %v1129, 7
        %v1131 = vsub.s32 %v1128, %v1130
        %v1132 = vrot.slane %v1125, %v1131
        %v1133 = vcombine.low %v1124, %v1132
        %v1134 = vcombine.high %v1124, %v1132
        %v1135 = vcombine.low %v1057, %v1064
        %v1137 = vunpack.c.l.s4 1983009808
        %v1138 = vunpack.c.0.s8 %v1137
        %v1139 = vlaneseq
        %v1140 = vshrl.u32 %v1139, 7
        %v1141 = vsub.s32 %v1138, %v1140
        %v1142 = vrot.slane %v1135, %v1141
        %v1143 = vcombine.low %v1081, %v1082
        %v1145 = vunpack.c.l.s4 1983009808
        %v1146 = vunpack.c.0.s8 %v1145
        %v1147 = vlaneseq
        %v1148 = vshrl.u32 %v1147, 7
        %v1149 = vsub.s32 %v1146, %v1148
        %v1150 = vrot.slane %v1143, %v1149
        %v1151 = vcombine.low %v1073, %v1080
        %v1153 = vunpack.c.l.s4 1983009808
        %v1154 = vunpack.c.0.s8 %v1153
        %v1155 = vlaneseq
        %v1156 = vshrl.u32 %v1155, 7
        %v1157 = vsub.s32 %v1154, %v1156
        %v1158 = vrot.slane %v1151, %v1157
        %v1159 = vcombine.low %v1083, %v1084
        %v1161 = vunpack.c.l.s4 1983009808
        %v1162 = vunpack.c.0.s8 %v1161
        %v1163 = vlaneseq
        %v1164 = vshrl.u32 %v1163, 7
        %v1165 = vsub.s32 %v1162, %v1164
        %v1166 = vrot.slane %v1159, %v1165
        %v1167 = vcombine.low %v1142, %v1150
        %v1169 = vunpack.c.l.s4 1934713408
        %v1170 = vunpack.c.0.s8 %v1169
        %v1171 = vlaneseq
        %v1172 = vshrl.u32 %v1171, 7
        %v1173 = vsub.s32 %v1170, %v1172
        %v1174 = vrot.slane %v1167, %v1173
        %v1175 = vcombine.low %v1158, %v1166
        %v1177 = vunpack.c.l.s4 1934713408
        %v1178 = vunpack.c.0.s8 %v1177
        %v1179 = vlaneseq
        %v1180 = vshrl.u32 %v1179, 7
        %v1181 = vsub.s32 %v1178, %v1180
        %v1182 = vrot.slane %v1175, %v1181
        %v1183 = vcombine.low %v1174, %v1182
        %v1184 = vcombine.high %v1174, %v1182
        %v1187 = vpack.i.b16 %v1183, %v1133
        %v1189 = vshrl.u32 %v1133, 16
        %v1190 = vshrl.u32 %v1183, 16
        %v1191 = vpack.i.b16 %v1190, %v1189
        %v1195 = vpack.i.b16 %v1184, %v1134
        %v1197 = vshrl.u32 %v1134, 16
        %v1198 = vshrl.u32 %v1184, 16
        %v1199 = vpack.i.b16 %v1198, %v1197
        %vm1201 = vcmask 64512
        %v1203 = vsel %vm1201, %v646, 0
        %v1206 = vsel %vm1201, %v919, 0
        %1208 = vmatprep.subr.bf16.mxu0 0
        %1209 = vmatpush1.bf16.xpose.msra.mxu0 %v1206
        %1210 = vmatprep.subr.bf16.mxu0 0
        %1211 = vmatpush1.bf16.xpose.msra.mxu0 0
        %1212 = vmatprep.subr.bf16.mxu0 0
        %1213 = vmatpush1.bf16.xpose.msra.mxu0 0
        %1214 = vmatprep.subr.bf16.mxu0 0
        %1215 = vmatpush1.bf16.xpose.msra.mxu0 0
        %1216 = vmatprep.subr.bf16.mxu0 0
        %1217 = vmatpush1.bf16.xpose.msra.mxu0 0
        %1218 = vmatprep.subr.bf16.mxu0 0
        %1219 = vmatpush1.bf16.xpose.msra.mxu0 0
        %1220 = vmatprep.subr.bf16.mxu0 0
        %1221 = vmatpush1.bf16.xpose.msra.mxu0 0
        %1222 = vmatprep.subr.bf16.mxu0 0
        %1223 = vmatpush1.bf16.xpose.msra.mxu0 0
        %1224 = vmatprep.subr.bf16.mxu0 0
        %1225 = vmatpush1.bf16.xpose.msra.mxu0 0
        %1226 = vmatprep.subr.bf16.mxu0 0
        %1227 = vmatpush1.bf16.xpose.msra.mxu0 0
        %1228 = vmatprep.subr.bf16.mxu0 0
        %1229 = vmatpush1.bf16.xpose.msra.mxu0 0
        %1230 = vmatprep.subr.bf16.mxu0 0
        %1231 = vmatpush1.bf16.xpose.msra.mxu0 0
        %1232 = vmatprep.subr.bf16.mxu0 0
        %1233 = vmatpush1.bf16.xpose.msra.mxu0 0
        %1234 = vmatprep.subr.bf16.mxu0 0
        %1235 = vmatpush1.bf16.xpose.msra.mxu0 0
        %1236 = vmatprep.subr.bf16.mxu0 0
        %1237 = vmatpush1.bf16.xpose.msra.mxu0 0
        %1238 = vmatprep.subr.bf16.mxu0 0
        %1239 = vmatpush1.bf16.xpose.msra.mxu0 0
        %1240 = vmatprep.mubr.bf16.mxu0 0
        %1241 = vmatmul.mubr.bf16.gmra.mrb[0].mxu0 %v1203
        %v1242 = vpop.f32.mrb[0].mxu0
        %v1243 = vadd.f32 %v373, %v1242
        %v1244 = vpop.f32.mrb[0].mxu0
        %v1245 = vpop.f32.mrb[0].mxu0
        %v1246 = vpop.f32.mrb[0].mxu0
        %1247 = vdwg.mxu0
        %v1249 = vsel %vm1201, %v649, 0
        %v1252 = vsel %vm1201, %v922, 0
        %1254 = vmatprep.subr.bf16.mxu0 0
        %1255 = vmatpush1.bf16.xpose.msra.mxu0 %v1252
        %1256 = vmatprep.subr.bf16.mxu0 0
        %1257 = vmatpush1.bf16.xpose.msra.mxu0 0
        %1258 = vmatprep.subr.bf16.mxu0 0
        %1259 = vmatpush1.bf16.xpose.msra.mxu0 0
        %1260 = vmatprep.subr.bf16.mxu0 0
        %1261 = vmatpush1.bf16.xpose.msra.mxu0 0
        %1262 = vmatprep.subr.bf16.mxu0 0
        %1263 = vmatpush1.bf16.xpose.msra.mxu0 0
        %1264 = vmatprep.subr.bf16.mxu0 0
        %1265 = vmatpush1.bf16.xpose.msra.mxu0 0
        %1266 = vmatprep.subr.bf16.mxu0 0
        %1267 = vmatpush1.bf16.xpose.msra.mxu0 0
        %1268 = vmatprep.subr.bf16.mxu0 0
        %1269 = vmatpush1.bf16.xpose.msra.mxu0 0
        %1270 = vmatprep.subr.bf16.mxu0 0
        %1271 = vmatpush1.bf16.xpose.msra.mxu0 0
        %1272 = vmatprep.subr.bf16.mxu0 0
        %1273 = vmatpush1.bf16.xpose.msra.mxu0 0
        %1274 = vmatprep.subr.bf16.mxu0 0
        %1275 = vmatpush1.bf16.xpose.msra.mxu0 0
        %1276 = vmatprep.subr.bf16.mxu0 0
        %1277 = vmatpush1.bf16.xpose.msra.mxu0 0
        %1278 = vmatprep.subr.bf16.mxu0 0
        %1279 = vmatpush1.bf16.xpose.msra.mxu0 0
        %1280 = vmatprep.subr.bf16.mxu0 0
        %1281 = vmatpush1.bf16.xpose.msra.mxu0 0
        %1282 = vmatprep.subr.bf16.mxu0 0
        %1283 = vmatpush1.bf16.xpose.msra.mxu0 0
        %1284 = vmatprep.subr.bf16.mxu0 0
        %1285 = vmatpush1.bf16.xpose.msra.mxu0 0
        %1286 = vmatprep.mubr.bf16.mxu0 0
        %1287 = vmatmul.mubr.bf16.gmra.mrb[0].mxu0 %v1249
        %v1288 = vpop.f32.mrb[0].mxu0
        %v1289 = vadd.f32 %v373, %v1288
        %v1290 = vpop.f32.mrb[0].mxu0
        %v1291 = vpop.f32.mrb[0].mxu0
        %v1292 = vpop.f32.mrb[0].mxu0
        %1293 = vdwg.mxu0
        %v1295 = vsel %vm1201, %v652, 0
        %v1298 = vsel %vm1201, %v925, 0
        %1300 = vmatprep.subr.bf16.mxu0 0
        %1301 = vmatpush1.bf16.xpose.msra.mxu0 %v1298
        %1302 = vmatprep.subr.bf16.mxu0 0
        %1303 = vmatpush1.bf16.xpose.msra.mxu0 0
        %1304 = vmatprep.subr.bf16.mxu0 0
        %1305 = vmatpush1.bf16.xpose.msra.mxu0 0
        %1306 = vmatprep.subr.bf16.mxu0 0
        %1307 = vmatpush1.bf16.xpose.msra.mxu0 0
        %1308 = vmatprep.subr.bf16.mxu0 0
        %1309 = vmatpush1.bf16.xpose.msra.mxu0 0
        %1310 = vmatprep.subr.bf16.mxu0 0
        %1311 = vmatpush1.bf16.xpose.msra.mxu0 0
        %1312 = vmatprep.subr.bf16.mxu0 0
        %1313 = vmatpush1.bf16.xpose.msra.mxu0 0
        %1314 = vmatprep.subr.bf16.mxu0 0
        %1315 = vmatpush1.bf16.xpose.msra.mxu0 0
        %1316 = vmatprep.subr.bf16.mxu0 0
        %1317 = vmatpush1.bf16.xpose.msra.mxu0 0
        %1318 = vmatprep.subr.bf16.mxu0 0
        %1319 = vmatpush1.bf16.xpose.msra.mxu0 0
        %1320 = vmatprep.subr.bf16.mxu0 0
        %1321 = vmatpush1.bf16.xpose.msra.mxu0 0
        %1322 = vmatprep.subr.bf16.mxu0 0
        %1323 = vmatpush1.bf16.xpose.msra.mxu0 0
        %1324 = vmatprep.subr.bf16.mxu0 0
        %1325 = vmatpush1.bf16.xpose.msra.mxu0 0
        %1326 = vmatprep.subr.bf16.mxu0 0
        %1327 = vmatpush1.bf16.xpose.msra.mxu0 0
        %1328 = vmatprep.subr.bf16.mxu0 0
        %1329 = vmatpush1.bf16.xpose.msra.mxu0 0
        %1330 = vmatprep.subr.bf16.mxu0 0
        %1331 = vmatpush1.bf16.xpose.msra.mxu0 0
        %1332 = vmatprep.mubr.bf16.mxu0 0
        %1333 = vmatmul.mubr.bf16.gmra.mrb[0].mxu0 %v1295
        %v1334 = vpop.f32.mrb[0].mxu0
        %v1335 = vadd.f32 %v373, %v1334
        %v1336 = vpop.f32.mrb[0].mxu0
        %v1337 = vpop.f32.mrb[0].mxu0
        %v1338 = vpop.f32.mrb[0].mxu0
        %1339 = vdwg.mxu0
        %v1341 = vsel %vm1201, %v655, 0
        %v1344 = vsel %vm1201, %v928, 0
        %1346 = vmatprep.subr.bf16.mxu0 0
        %1347 = vmatpush1.bf16.xpose.msra.mxu0 %v1344
        %1348 = vmatprep.subr.bf16.mxu0 0
        %1349 = vmatpush1.bf16.xpose.msra.mxu0 0
        %1350 = vmatprep.subr.bf16.mxu0 0
        %1351 = vmatpush1.bf16.xpose.msra.mxu0 0
        %1352 = vmatprep.subr.bf16.mxu0 0
        %1353 = vmatpush1.bf16.xpose.msra.mxu0 0
        %1354 = vmatprep.subr.bf16.mxu0 0
        %1355 = vmatpush1.bf16.xpose.msra.mxu0 0
        %1356 = vmatprep.subr.bf16.mxu0 0
        %1357 = vmatpush1.bf16.xpose.msra.mxu0 0
        %1358 = vmatprep.subr.bf16.mxu0 0
        %1359 = vmatpush1.bf16.xpose.msra.mxu0 0
        %1360 = vmatprep.subr.bf16.mxu0 0
        %1361 = vmatpush1.bf16.xpose.msra.mxu0 0
        %1362 = vmatprep.subr.bf16.mxu0 0
        %1363 = vmatpush1.bf16.xpose.msra.mxu0 0
        %1364 = vmatprep.subr.bf16.mxu0 0
        %1365 = vmatpush1.bf16.xpose.msra.mxu0 0
        %1366 = vmatprep.subr.bf16.mxu0 0
        %1367 = vmatpush1.bf16.xpose.msra.mxu0 0
        %1368 = vmatprep.subr.bf16.mxu0 0
        %1369 = vmatpush1.bf16.xpose.msra.mxu0 0
        %1370 = vmatprep.subr.bf16.mxu0 0
        %1371 = vmatpush1.bf16.xpose.msra.mxu0 0
        %1372 = vmatprep.subr.bf16.mxu0 0
        %1373 = vmatpush1.bf16.xpose.msra.mxu0 0
        %1374 = vmatprep.subr.bf16.mxu0 0
        %1375 = vmatpush1.bf16.xpose.msra.mxu0 0
        %1376 = vmatprep.subr.bf16.mxu0 0
        %1377 = vmatpush1.bf16.xpose.msra.mxu0 0
        %1378 = vmatprep.mubr.bf16.mxu0 0
        %1379 = vmatmul.mubr.bf16.gmra.mrb[0].mxu0 %v1341
        %v1380 = vpop.f32.mrb[0].mxu0
        %v1381 = vadd.f32 %v373, %v1380
        %v1382 = vpop.f32.mrb[0].mxu0
        %v1383 = vpop.f32.mrb[0].mxu0
        %v1384 = vpop.f32.mrb[0].mxu0
        %1385 = vdwg.mxu0
        %vm1386 = vcmask 130048
        %v1387 = vsel %vm1386, %v1243, -inf
        %1388 = vmax.xlane.f32.xlu0 %v1387
        %v1389 = vpop.xlane.xlu0 %1388
        %v1390 = vsel %vm1386, %v1289, -inf
        %1391 = vmax.xlane.f32.xlu0 %v1390
        %v1392 = vpop.xlane.xlu0 %1391
        %v1393 = vsel %vm1386, %v1335, -inf
        %1394 = vmax.xlane.f32.xlu0 %v1393
        %v1395 = vpop.xlane.xlu0 %1394
        %v1396 = vsel %vm1386, %v1381, -inf
        %1397 = vmax.xlane.f32.xlu0 %v1396
        %v1398 = vpop.xlane.xlu0 %1397
        %v1399 = vsub.f32 %v1243, %v1389
        %v1400 = vsub.f32 %v1289, %v1392
        %v1401 = vsub.f32 %v1335, %v1395
        %v1402 = vsub.f32 %v1381, %v1398
        %v1403 = vmul.f32 %v1399, 1.442695
        %v1404 = vpow.pop %v1403
        %v1405 = vmul.f32 %v1400, 1.442695
        %v1406 = vpow.pop %v1405
        %v1407 = vmul.f32 %v1401, 1.442695
        %v1408 = vpow.pop %v1407
        %v1409 = vmul.f32 %v1402, 1.442695
        %v1410 = vpow.pop %v1409
        %v1411 = vsel %vm1386, %v1404, 0.0
        %1412 = vadd.xlane.f32.xlu0 %v1411
        %v1413 = vpop.xlane.xlu0 %1412
        %v1414 = vsel %vm1386, %v1406, 0.0
        %1415 = vadd.xlane.f32.xlu0 %v1414
        %v1416 = vpop.xlane.xlu0 %1415
        %v1417 = vsel %vm1386, %v1408, 0.0
        %1418 = vadd.xlane.f32.xlu0 %v1417
        %v1419 = vpop.xlane.xlu0 %1418
        %v1420 = vsel %vm1386, %v1410, 0.0
        %1421 = vadd.xlane.f32.xlu0 %v1420
        %v1422 = vpop.xlane.xlu0 %1421
        %v1423 = vrcp.pop %v1413
        %v1424 = vrcp.pop %v1416
        %v1425 = vrcp.pop %v1419
        %v1426 = vrcp.pop %v1422
        %v1427 = vmul.f32 %v1404, %v1423
        %v1428 = vmul.f32 %v1406, %v1424
        %v1429 = vmul.f32 %v1408, %v1425
        %v1430 = vmul.f32 %v1410, %v1426
        %v1431 = vpack.c.bf16 %v1427, %v1427
        %v1432 = vpack.c.bf16 %v1428, %v1428
        %v1433 = vpack.c.bf16 %v1429, %v1429
        %v1434 = vpack.c.bf16 %v1430, %v1430
        %v1436 = vsel %vm1386, %v1431, 0
        %1438 = vmatprep.subr.bf16.mxu0 0
        %1439 = vmatpush1.bf16.msra.mxu0 %v1187
        %1440 = vmatprep.subr.bf16.mxu0 0
        %1441 = vmatpush1.bf16.msra.mxu0 0
        %1442 = vmatprep.subr.bf16.mxu0 0
        %1443 = vmatpush1.bf16.msra.mxu0 0
        %1444 = vmatprep.subr.bf16.mxu0 0
        %1445 = vmatpush1.bf16.msra.mxu0 0
        %1446 = vmatprep.subr.bf16.mxu0 0
        %1447 = vmatpush1.bf16.msra.mxu0 0
        %1448 = vmatprep.subr.bf16.mxu0 0
        %1449 = vmatpush1.bf16.msra.mxu0 0
        %1450 = vmatprep.subr.bf16.mxu0 0
        %1451 = vmatpush1.bf16.msra.mxu0 0
        %1452 = vmatprep.subr.bf16.mxu0 0
        %1453 = vmatpush1.bf16.msra.mxu0 0
        %1454 = vmatprep.subr.bf16.mxu0 0
        %1455 = vmatpush1.bf16.msra.mxu0 0
        %1456 = vmatprep.subr.bf16.mxu0 0
        %1457 = vmatpush1.bf16.msra.mxu0 0
        %1458 = vmatprep.subr.bf16.mxu0 0
        %1459 = vmatpush1.bf16.msra.mxu0 0
        %1460 = vmatprep.subr.bf16.mxu0 0
        %1461 = vmatpush1.bf16.msra.mxu0 0
        %1462 = vmatprep.subr.bf16.mxu0 0
        %1463 = vmatpush1.bf16.msra.mxu0 0
        %1464 = vmatprep.subr.bf16.mxu0 0
        %1465 = vmatpush1.bf16.msra.mxu0 0
        %1466 = vmatprep.subr.bf16.mxu0 0
        %1467 = vmatpush1.bf16.msra.mxu0 0
        %1468 = vmatprep.subr.bf16.mxu0 0
        %1469 = vmatpush1.bf16.msra.mxu0 0
        %1470 = vmatprep.mubr.bf16.mxu0 0
        %1471 = vmatmul.mubr.bf16.gmra.mrb[0].mxu0 %v1436
        %v1472 = vpop.f32.mrb[0].mxu0
        %v1473 = vadd.f32 0.0, %v1472
        %v1474 = vpop.f32.mrb[0].mxu0
        %v1475 = vpop.f32.mrb[0].mxu0
        %v1476 = vpop.f32.mrb[0].mxu0
        %1477 = vdwg.mxu0
        %v1479 = vsel %vm1386, %v1432, 0
        %1481 = vmatprep.subr.bf16.mxu0 0
        %1482 = vmatpush1.bf16.msra.mxu0 %v1191
        %1483 = vmatprep.subr.bf16.mxu0 0
        %1484 = vmatpush1.bf16.msra.mxu0 0
        %1485 = vmatprep.subr.bf16.mxu0 0
        %1486 = vmatpush1.bf16.msra.mxu0 0
        %1487 = vmatprep.subr.bf16.mxu0 0
        %1488 = vmatpush1.bf16.msra.mxu0 0
        %1489 = vmatprep.subr.bf16.mxu0 0
        %1490 = vmatpush1.bf16.msra.mxu0 0
        %1491 = vmatprep.subr.bf16.mxu0 0
        %1492 = vmatpush1.bf16.msra.mxu0 0
        %1493 = vmatprep.subr.bf16.mxu0 0
        %1494 = vmatpush1.bf16.msra.mxu0 0
        %1495 = vmatprep.subr.bf16.mxu0 0
        %1496 = vmatpush1.bf16.msra.mxu0 0
        %1497 = vmatprep.subr.bf16.mxu0 0
        %1498 = vmatpush1.bf16.msra.mxu0 0
        %1499 = vmatprep.subr.bf16.mxu0 0
        %1500 = vmatpush1.bf16.msra.mxu0 0
        %1501 = vmatprep.subr.bf16.mxu0 0
        %1502 = vmatpush1.bf16.msra.mxu0 0
        %1503 = vmatprep.subr.bf16.mxu0 0
        %1504 = vmatpush1.bf16.msra.mxu0 0
        %1505 = vmatprep.subr.bf16.mxu0 0
        %1506 = vmatpush1.bf16.msra.mxu0 0
        %1507 = vmatprep.subr.bf16.mxu0 0
        %1508 = vmatpush1.bf16.msra.mxu0 0
        %1509 = vmatprep.subr.bf16.mxu0 0
        %1510 = vmatpush1.bf16.msra.mxu0 0
        %1511 = vmatprep.subr.bf16.mxu0 0
        %1512 = vmatpush1.bf16.msra.mxu0 0
        %1513 = vmatprep.mubr.bf16.mxu0 0
        %1514 = vmatmul.mubr.bf16.gmra.mrb[0].mxu0 %v1479
        %v1515 = vpop.f32.mrb[0].mxu0
        %v1516 = vadd.f32 0.0, %v1515
        %v1517 = vpop.f32.mrb[0].mxu0
        %v1518 = vpop.f32.mrb[0].mxu0
        %v1519 = vpop.f32.mrb[0].mxu0
        %1520 = vdwg.mxu0
        %v1522 = vsel %vm1386, %v1433, 0
        %1524 = vmatprep.subr.bf16.mxu0 0
        %1525 = vmatpush1.bf16.msra.mxu0 %v1195
        %1526 = vmatprep.subr.bf16.mxu0 0
        %1527 = vmatpush1.bf16.msra.mxu0 0
        %1528 = vmatprep.subr.bf16.mxu0 0
        %1529 = vmatpush1.bf16.msra.mxu0 0
        %1530 = vmatprep.subr.bf16.mxu0 0
        %1531 = vmatpush1.bf16.msra.mxu0 0
        %1532 = vmatprep.subr.bf16.mxu0 0
        %1533 = vmatpush1.bf16.msra.mxu0 0
        %1534 = vmatprep.subr.bf16.mxu0 0
        %1535 = vmatpush1.bf16.msra.mxu0 0
        %1536 = vmatprep.subr.bf16.mxu0 0
        %1537 = vmatpush1.bf16.msra.mxu0 0
        %1538 = vmatprep.subr.bf16.mxu0 0
        %1539 = vmatpush1.bf16.msra.mxu0 0
        %1540 = vmatprep.subr.bf16.mxu0 0
        %1541 = vmatpush1.bf16.msra.mxu0 0
        %1542 = vmatprep.subr.bf16.mxu0 0
        %1543 = vmatpush1.bf16.msra.mxu0 0
        %1544 = vmatprep.subr.bf16.mxu0 0
        %1545 = vmatpush1.bf16.msra.mxu0 0
        %1546 = vmatprep.subr.bf16.mxu0 0
        %1547 = vmatpush1.bf16.msra.mxu0 0
        %1548 = vmatprep.subr.bf16.mxu0 0
        %1549 = vmatpush1.bf16.msra.mxu0 0
        %1550 = vmatprep.subr.bf16.mxu0 0
        %1551 = vmatpush1.bf16.msra.mxu0 0
        %1552 = vmatprep.subr.bf16.mxu0 0
        %1553 = vmatpush1.bf16.msra.mxu0 0
        %1554 = vmatprep.subr.bf16.mxu0 0
        %1555 = vmatpush1.bf16.msra.mxu0 0
        %1556 = vmatprep.mubr.bf16.mxu0 0
        %1557 = vmatmul.mubr.bf16.gmra.mrb[0].mxu0 %v1522
        %v1558 = vpop.f32.mrb[0].mxu0
        %v1559 = vadd.f32 0.0, %v1558
        %v1560 = vpop.f32.mrb[0].mxu0
        %v1561 = vpop.f32.mrb[0].mxu0
        %v1562 = vpop.f32.mrb[0].mxu0
        %1563 = vdwg.mxu0
        %v1565 = vsel %vm1386, %v1434, 0
        %1567 = vmatprep.subr.bf16.mxu0 0
        %1568 = vmatpush1.bf16.msra.mxu0 %v1199
        %1569 = vmatprep.subr.bf16.mxu0 0
        %1570 = vmatpush1.bf16.msra.mxu0 0
        %1571 = vmatprep.subr.bf16.mxu0 0
        %1572 = vmatpush1.bf16.msra.mxu0 0
        %1573 = vmatprep.subr.bf16.mxu0 0
        %1574 = vmatpush1.bf16.msra.mxu0 0
        %1575 = vmatprep.subr.bf16.mxu0 0
        %1576 = vmatpush1.bf16.msra.mxu0 0
        %1577 = vmatprep.subr.bf16.mxu0 0
        %1578 = vmatpush1.bf16.msra.mxu0 0
        %1579 = vmatprep.subr.bf16.mxu0 0
        %1580 = vmatpush1.bf16.msra.mxu0 0
        %1581 = vmatprep.subr.bf16.mxu0 0
        %1582 = vmatpush1.bf16.msra.mxu0 0
        %1583 = vmatprep.subr.bf16.mxu0 0
        %1584 = vmatpush1.bf16.msra.mxu0 0
        %1585 = vmatprep.subr.bf16.mxu0 0
        %1586 = vmatpush1.bf16.msra.mxu0 0
        %1587 = vmatprep.subr.bf16.mxu0 0
        %1588 = vmatpush1.bf16.msra.mxu0 0
        %1589 = vmatprep.subr.bf16.mxu0 0
        %1590 = vmatpush1.bf16.msra.mxu0 0
        %1591 = vmatprep.subr.bf16.mxu0 0
        %1592 = vmatpush1.bf16.msra.mxu0 0
        %1593 = vmatprep.subr.bf16.mxu0 0
        %1594 = vmatpush1.bf16.msra.mxu0 0
        %1595 = vmatprep.subr.bf16.mxu0 0
        %1596 = vmatpush1.bf16.msra.mxu0 0
        %1597 = vmatprep.subr.bf16.mxu0 0
        %1598 = vmatpush1.bf16.msra.mxu0 0
        %1599 = vmatprep.mubr.bf16.mxu0 0
        %1600 = vmatmul.mubr.bf16.gmra.mrb[0].mxu0 %v1565
        %v1601 = vpop.f32.mrb[0].mxu0
        %v1602 = vadd.f32 0.0, %v1601
        %v1603 = vpop.f32.mrb[0].mxu0
        %v1604 = vpop.f32.mrb[0].mxu0
        %v1605 = vpop.f32.mrb[0].mxu0
        %1606 = vdwg.mxu0
        %v1607 = vpack.c.bf16 %v1473, %v1473
        %v1609 = vunpack.c.l.s4 1983009808
        %v1610 = vunpack.c.0.s8 %v1609
        %v1611 = vlaneseq
        %v1612 = vshrl.u32 %v1611, 7
        %v1613 = vsub.s32 %v1610, %v1612
        %v1614 = vrot.slane %v1607, %v1613
        %v1615 = vpack.c.bf16 %v1559, %v1559
        %v1617 = vunpack.c.l.s4 1983009808
        %v1618 = vunpack.c.0.s8 %v1617
        %v1619 = vlaneseq
        %v1620 = vshrl.u32 %v1619, 7
        %v1621 = vsub.s32 %v1618, %v1620
        %v1622 = vrot.slane %v1615, %v1621
        %v1623 = vcombine.low %v1614, %v1622
        %v1624 = vcombine.high %v1614, %v1622
        %v1626 = vunpack.c.l.s4 1934713408
        %v1627 = vunpack.c.0.s8 %v1626
        %v1628 = vlaneseq
        %v1629 = vshrl.u32 %v1628, 7
        %v1630 = vsub.s32 %v1627, %v1629
        %v1631 = vrot.slane %v1623, %v1630
        %v1633 = vunpack.c.l.s4 1934713408
        %v1634 = vunpack.c.0.s8 %v1633
        %v1635 = vlaneseq
        %v1636 = vshrl.u32 %v1635, 7
        %v1637 = vsub.s32 %v1634, %v1636
        %v1638 = vrot.slane %v1624, %v1637
        %v1639 = vcombine.high %v1631, 0
        %v1640 = vcombine.high %v1638, 0
        %v1641 = vpack.c.bf16 %v1516, %v1516
        %v1643 = vunpack.c.l.s4 1983009808
        %v1644 = vunpack.c.0.s8 %v1643
        %v1645 = vlaneseq
        %v1646 = vshrl.u32 %v1645, 7
        %v1647 = vsub.s32 %v1644, %v1646
        %v1648 = vrot.slane %v1641, %v1647
        %v1649 = vpack.c.bf16 %v1602, %v1602
        %v1651 = vunpack.c.l.s4 1983009808
        %v1652 = vunpack.c.0.s8 %v1651
        %v1653 = vlaneseq
        %v1654 = vshrl.u32 %v1653, 7
        %v1655 = vsub.s32 %v1652, %v1654
        %v1656 = vrot.slane %v1649, %v1655
        %v1657 = vcombine.low %v1648, %v1656
        %v1658 = vcombine.high %v1648, %v1656
        %v1660 = vunpack.c.l.s4 1934713408
        %v1661 = vunpack.c.0.s8 %v1660
        %v1662 = vlaneseq
        %v1663 = vshrl.u32 %v1662, 7
        %v1664 = vsub.s32 %v1661, %v1663
        %v1665 = vrot.slane %v1657, %v1664
        %v1667 = vunpack.c.l.s4 1934713408
        %v1668 = vunpack.c.0.s8 %v1667
        %v1669 = vlaneseq
        %v1670 = vshrl.u32 %v1669, 7
        %v1671 = vsub.s32 %v1668, %v1670
        %v1672 = vrot.slane %v1658, %v1671
        %v1673 = vcombine.high %v1665, 0
        %v1674 = vcombine.high %v1672, 0
        %v1677 = vpack.i.b16 %v1665, %v1631
        %v1679 = vshrl.u32 %v1631, 16
        %v1680 = vshrl.u32 %v1665, 16
        %v1681 = vpack.i.b16 %v1680, %v1679
        %v1685 = vpack.i.b16 %v1673, %v1639
        %v1687 = vshrl.u32 %v1639, 16
        %v1688 = vshrl.u32 %v1673, 16
        %v1689 = vpack.i.b16 %v1688, %v1687
        %v1693 = vpack.i.b16 %v1672, %v1638
        %v1695 = vshrl.u32 %v1638, 16
        %v1696 = vshrl.u32 %v1672, 16
        %v1697 = vpack.i.b16 %v1696, %v1695
        %v1701 = vpack.i.b16 %v1674, %v1640
        %v1703 = vshrl.u32 %v1640, 16
        %v1704 = vshrl.u32 %v1674, 16
        %v1705 = vpack.i.b16 %v1704, %v1703
        %v1707 = vcombine.low %v1677, %v1693
        %v1709 = vunpack.c.l.s4 1983009808
        %v1710 = vunpack.c.0.s8 %v1709
        %v1711 = vlaneseq
        %v1712 = vshrl.u32 %v1711, 7
        %v1713 = vsub.s32 %v1710, %v1712
        %v1714 = vrot.slane %v1707, %v1713
        %v1715 = vcombine.low %v1685, %v1701
        %v1717 = vunpack.c.l.s4 1983009808
        %v1718 = vunpack.c.0.s8 %v1717
        %v1719 = vlaneseq
        %v1720 = vshrl.u32 %v1719, 7
        %v1721 = vsub.s32 %v1718, %v1720
        %v1722 = vrot.slane %v1715, %v1721
        %v1723 = vcombine.low %v1714, %v1722
        %v1725 = vunpack.c.l.s4 1934713408
        %v1726 = vunpack.c.0.s8 %v1725
        %v1727 = vlaneseq
        %v1728 = vshrl.u32 %v1727, 7
        %v1729 = vsub.s32 %v1726, %v1728
        %v1730 = vrot.slane %v1723, %v1729
        %v1731 = vcombine.high %v1730, 0
        %v1732 = vcombine.low %v1681, %v1697
        %v1734 = vunpack.c.l.s4 1983009808
        %v1735 = vunpack.c.0.s8 %v1734
        %v1736 = vlaneseq
        %v1737 = vshrl.u32 %v1736, 7
        %v1738 = vsub.s32 %v1735, %v1737
        %v1739 = vrot.slane %v1732, %v1738
        %v1740 = vcombine.low %v1689, %v1705
        %v1742 = vunpack.c.l.s4 1983009808
        %v1743 = vunpack.c.0.s8 %v1742
        %v1744 = vlaneseq
        %v1745 = vshrl.u32 %v1744, 7
        %v1746 = vsub.s32 %v1743, %v1745
        %v1747 = vrot.slane %v1740, %v1746
        %v1748 = vcombine.low %v1739, %v1747
        %v1750 = vunpack.c.l.s4 1934713408
        %v1751 = vunpack.c.0.s8 %v1750
        %v1752 = vlaneseq
        %v1753 = vshrl.u32 %v1752, 7
        %v1754 = vsub.s32 %v1751, %v1753
        %v1755 = vrot.slane %v1748, %v1754
        %v1756 = vcombine.high %v1755, 0
        %v1759 = vpack.i.b16 %v1755, %v1730
        %v1760 = vshrl.u32 %v1730, 16
        %v1761 = vshrl.u32 %v1755, 16
        %v1762 = vpack.i.b16 %v1761, %v1760
        %v1765 = vpack.i.b16 %v1756, %v1731
        %v1766 = vshrl.u32 %v1731, 16
        %v1767 = vshrl.u32 %v1756, 16
        %v1768 = vpack.i.b16 %v1767, %v1766
        %1769 = vrot.lane.b32.xlu0 %v1762, 8
        %v1770 = vpop.permute.xlu0 %1769
        %1771 = vrot.lane.b32.xlu0 %v1765, 16
        %v1772 = vpop.permute.xlu0 %1771
        %1773 = vrot.lane.b32.xlu0 %v1768, 24
        %v1774 = vpop.permute.xlu0 %1773
        %v1777 = vsel %vm1201, %v1759, %v1770
        %v1779 = vsel %vm1386, %v1777, %v1772
        %vm1780 = vcmask 195584
        %v1782 = vsel %vm1780, %v1779, %v1774
        %v1787 = vunpack.c.l.b16 %v367
        %v1788 = vunpack.c.l.b16 %v368
        %v1789 = vunpack.c.l.b16 %v369
        %v1790 = vunpack.c.l.b16 %v370
        %v1791 = vpack.c.b16 %v1788, %v1787
        %v1792 = vpack.c.b16 %v1790, %v1789
        %v1795 = vsel %vm386, %v1782, 0
        %1797 = vmatprep.subr.bf16.mxu0 0
        %1798 = vmatpush1.bf16.msra.mxu0 %v1791
        %1799 = vmatprep.subr.bf16.mxu0 0
        %1800 = vmatpush1.bf16.msra.mxu0 %v1792
        %1801 = vmatprep.subr.bf16.mxu0 0
        %1802 = vmatpush1.bf16.msra.mxu0 0
        %1803 = vmatprep.subr.bf16.mxu0 0
        %1804 = vmatpush1.bf16.msra.mxu0 0
        %1805 = vmatprep.subr.bf16.mxu0 0
        %1806 = vmatpush1.bf16.msra.mxu0 0
        %1807 = vmatprep.subr.bf16.mxu0 0
        %1808 = vmatpush1.bf16.msra.mxu0 0
        %1809 = vmatprep.subr.bf16.mxu0 0
        %1810 = vmatpush1.bf16.msra.mxu0 0
        %1811 = vmatprep.subr.bf16.mxu0 0
        %1812 = vmatpush1.bf16.msra.mxu0 0
        %1813 = vmatprep.subr.bf16.mxu0 0
        %1814 = vmatpush1.bf16.msra.mxu0 0
        %1815 = vmatprep.subr.bf16.mxu0 0
        %1816 = vmatpush1.bf16.msra.mxu0 0
        %1817 = vmatprep.subr.bf16.mxu0 0
        %1818 = vmatpush1.bf16.msra.mxu0 0
        %1819 = vmatprep.subr.bf16.mxu0 0
        %1820 = vmatpush1.bf16.msra.mxu0 0
        %1821 = vmatprep.subr.bf16.mxu0 0
        %1822 = vmatpush1.bf16.msra.mxu0 0
        %1823 = vmatprep.subr.bf16.mxu0 0
        %1824 = vmatpush1.bf16.msra.mxu0 0
        %1825 = vmatprep.subr.bf16.mxu0 0
        %1826 = vmatpush1.bf16.msra.mxu0 0
        %1827 = vmatprep.subr.bf16.mxu0 0
        %1828 = vmatpush1.bf16.msra.mxu0 0
        %1829 = vmatprep.mubr.bf16.mxu0 0
        %1830 = vmatmul.mubr.bf16.gmra.mrb[0].mxu0 %v1795
        %v1831 = vpop.f32.mrb[0].mxu0
        %v1832 = vadd.f32 0.0, %v1831
        %v1833 = vpop.f32.mrb[0].mxu0
        %v1834 = vpop.f32.mrb[0].mxu0
        %v1835 = vpop.f32.mrb[0].mxu0
        %1836 = vdwg.mxu0
        %v1837 = vadd.f32 %v356, %v1832
        %v1838 = vsel %vm386, %v1837, 0.0
        %1839 = vadd.xlane.f32.xlu0 %v1838
        %v1840 = vpop.xlane.xlu0 %1839
        %v1841 = vrcp.pop 32.0
        %v1842 = vmul.f32 %v1840, %v1841
        %v1843 = vsub.f32 %v1837, %v1842
        %v1844 = vmul.f32 %v1843, %v1843
        %v1845 = vsel %vm386, %v1844, 0.0
        %1846 = vadd.xlane.f32.xlu0 %v1845
        %v1847 = vpop.xlane.xlu0 %1846
        %v1848 = vmul.f32 %v1847, %v1841
        %v1849 = vadd.f32 %v1848, 1e-05
        %v1850 = vrsqrt.pop %v1849
        %v1851 = vmul.f32 %v1843, %v1850
        %v1853 = vlaneseq
        %v1854 = vshrl.u32 %v1853, 7
        %v1855 = vsub.s32 0, %v1854
        %v1856 = vrot.slane %v371, %v1855
        %v1858 = vmul.f32 %v1851, %v1856
        %v1860 = vlaneseq
        %v1861 = vshrl.u32 %v1860, 7
        %v1862 = vsub.s32 0, %v1861
        %v1863 = vrot.slane %v372, %v1862
        %v1865 = vadd.f32 %v1858, %v1863
        %1866 = vst.msk [vmem:[%s352] sm:$0xff] %vm386, %v1865
        %s1867 = sand.u32 %s186, 1
        %s1868 = scalar_lea.sflag [#allocation4], %s1867
        %s1869 = sand.u32 %s186, 1
        %s1870 = smul.addr %s1869, 8
        %s1871 = scalar_lea.vmem [#allocation11], %s1870
        // Predicated region
        $region69: #{tpu_custom_call.1} parent=47 // pred_check
          %p1872 = pneg %p196
        $region70: #{tpu_custom_call.1} parent=47 // pred_check_branch
          %1874 = sbr.rel (%p1872) target = $region72
        $region71: #{tpu_custom_call.1} parent=47 // pred_region
          %s1876 = ssub.s32 128, 128
          %1877 = vsyncadd %s1868, %s1876
          %s1878 = smul.addr %s26, 128
          %s1879 = scalar_lea.hbm %s7, %s1878
          %s1881 = sshll.u32 %s1871, 4
          %s1882 = int_to_ptr.vmem [resolvable:$true] %s1881
          %1884 = dma.vmem_to_hbm [thread:$0]  %s1882, 128, %s1879, %s1868
        $region72: #{tpu_custom_call.1} parent=47 // pred_fallthru
          _
      $region48: #{tpu_custom_call.1} parent=5 // pred_fallthru
        _
      %p1885 = scmp.le.s32.totalorder 2, %s21
      // Predicated region
      $region73: #{tpu_custom_call.1} parent=5 // pred_check
        %p1886 = pneg %p1885
      $region74: #{tpu_custom_call.1} parent=5 // pred_check_branch
        %1888 = sbr.rel (%p1886) target = $region76
      $region75: #{tpu_custom_call.1} parent=5 // pred_region
        %s1889 = ssub.s32 %s21, 2
        // Predicated region
        $region77: #{tpu_custom_call.1} parent=75 // pred_check
          %p1890 = pneg %p202
        $region78: #{tpu_custom_call.1} parent=75 // pred_check_branch
          %1892 = sbr.rel (%p1890) target = $region80
        $region79: #{tpu_custom_call.1} parent=75 // pred_region
          %s1893 = sand.u32 %s187, 1
          %s1894 = scalar_lea.sflag [#allocation4], %s1893
          %s1895 = sand.u32 %s187, 1
          %s1896 = smul.addr %s1895, 8
          %s1897 = scalar_lea.vmem [#allocation11], %s1896
          %1898 = dma.done %s1894, 128
        $region80: #{tpu_custom_call.1} parent=75 // pred_fallthru
          _
      $region76: #{tpu_custom_call.1} parent=5 // pred_fallthru
        _
    $region6: #{tpu_custom_call.1} parent=1 // loop_footer
      %s25 = sadd.s32 1, %s21
    $region7: #{tpu_custom_call.1} parent=1 // loop_footer_branch
      %20 = sbr.rel target = $region3
    $region8: #{tpu_custom_call.1} parent=1 // loop_exit
      _
    %1899 = vsyncpa [#allocation3], 1
    %s1900 = scalar_lea.sflag [#allocation3], 1
    %1901 = vsyncpa %s1900, 1
    %1902 = vsyncpa [#allocation6], 1
    %1903 = vsyncpa [#allocation9], 1
    %1904 = vsyncpa [#allocation4], 1
    %s1905 = scalar_lea.sflag [#allocation4], 1
    %1906 = vsyncpa %s1905, 1

</llo_original>
